<compile_context>
chip_gen: v7x
topology: tpu7x:2x2x1
jax: 0.10.0
libtpu: 0.0.40
codegen_flags: <defaults>
</compile_context>

<pallas_src>
import jax
import jax.numpy as jnp
from jax.experimental import pallas as pl
from jax.experimental.pallas import tpu as pltpu


# ----------------------------------------------------------------------------
# Kernel
# ----------------------------------------------------------------------------
def _mymodel_kernel(x_ref, w1_ref, b1_ref, w2_ref, b2_ref, o_ref, acc_ref):
    kk = pl.program_id(2)

    @pl.when(kk == 0)
    def _init():
        acc_ref[...] = jnp.zeros_like(acc_ref)

    # backbone Linear: cast x f32->bf16 in vregs (no extra HBM pass),
    # bf16 MXU matmul, f32 accumulation over the K grid axis.
    acc_ref[...] += jnp.dot(x_ref[...].astype(w1_ref.dtype), w1_ref[...],
                            preferred_element_type=jnp.float32)

    @pl.when(kk == pl.num_programs(2) - 1)
    def _finalize():
        h = jnp.maximum(acc_ref[...] + b1_ref[...], 0.0)        # bias + ReLU in f32 (VPU)
        y = jnp.dot(h.astype(w2_ref.dtype), w2_ref[...],        # embedder Linear (MXU)
                    preferred_element_type=jnp.float32)
        o_ref[...] = (y + b2_ref[...]).astype(o_ref.dtype)


# ----------------------------------------------------------------------------
# Helpers
# ----------------------------------------------------------------------------
def _round_up(v, m):
    return ((v + m - 1) // m) * m


def _device_kind():
    try:
        return jax.devices()[0].device_kind.lower()
    except Exception:
        return ""


def _vmem_limit_bytes():
    # Generation-aware limit: leave headroom below physical VMEM
    # (v7x: 64 MiB -> ~56 MiB; v5e/v6e: 128 MiB -> 100 MiB).
    try:
        cap = int(getattr(pltpu.get_tpu_info(), "vmem_capacity_bytes", 64 << 20))
    except Exception:
        cap = 64 << 20
    return max(32 << 20, min(cap - (8 << 20), 100 << 20))


def _pick_tk(k, cap):
    """Largest multiple of 128 <= cap that divides k (or k itself if small)."""
    if k <= cap:
        return k
    for cand in range((cap // 128) * 128, 0, -128):
        if k % cand == 0:
            return cand
    return None


def prepare_params(w1, b1, w2, b2, *, tk_cap=4096, f_align=128, e_align=128):
    """One-time weight prep (transpose, bf16 cast, zero-pad) OUTSIDE the hot path.

    w1: (F, K)  b1: (F,)   -- backbone Linear, torch (out, in) layout
    w2: (E, F)  b2: (E,)   -- embedder Linear, torch (out, in) layout
    """
    f, k = w1.shape
    e = w2.shape[0]
    assert w2.shape[1] == f

    tk = _pick_tk(k, tk_cap)
    if tk is None:                      # no nice divisor: pad K once (weights here, x per call)
        tk = (tk_cap // 128) * 128
        k_pad = _round_up(k, tk)
    else:
        k_pad = k
    f_pad = _round_up(f, f_align)
    e_pad = _round_up(e, e_align)

    w1_t = jnp.pad(w1.T.astype(jnp.bfloat16), ((0, k_pad - k), (0, f_pad - f)))   # (Kp, Fp)
    b1_p = jnp.pad(b1.astype(jnp.float32), (0, f_pad - f)).reshape(1, f_pad)
    w2_t = jnp.pad(w2.T.astype(jnp.bfloat16), ((0, f_pad - f), (0, e_pad - e)))   # (Fp, Ep)
    b2_p = jnp.pad(b2.astype(jnp.float32), (0, e_pad - e)).reshape(1, e_pad)

    return dict(w1_t=w1_t, b1=b1_p, w2_t=w2_t, b2=b2_p,
                k=k, k_pad=k_pad, tk=tk, f=f, f_pad=f_pad, e=e, e_pad=e_pad)


# ----------------------------------------------------------------------------
# Forward
# ----------------------------------------------------------------------------
def mymodel_forward(x_nchw, params):
    """x_nchw: (N, C, H, W) float32. Returns (N, embed_dim) float32.

    Matches torch `embedder(relu(backbone_linear(x.view(N,-1))))` with bf16 MXU
    operands and f32 accumulation / bias / ReLU.
    """
    n = x_nchw.shape[0]
    k = x_nchw.shape[1] * x_nchw.shape[2] * x_nchw.shape[3]
    assert k == params["k"], "input spatial dims do not match prepared weights"
    x_flat = x_nchw.reshape(n, k)                     # row-major == torch .view(n, -1)

    kind = _device_kind()
    tn_cap = 256 if ("v6" in kind or "v7" in kind) else 128   # 256-wide MXU gens
    two_tc = "v7" in kind                                      # 2 TensorCores / chip

    # --- batch tiling (sublane-aligned, no masked stores) --------------------
    n_min = _round_up(max(n, 8), 8)
    tn = min(n_min, tn_cap)
    n_pad = _round_up(n_min, tn)
    grid_n = n_pad // tn

    k_pad, tk = params["k_pad"], params["tk"]
    f_pad, e_pad = params["f_pad"], params["e_pad"]
    grid_k = k_pad // tk

    pad_rows, pad_cols = n_pad - n, k_pad - k
    if pad_rows or pad_cols:
        # f32 pad only when shapes are ragged; weights were padded once in prep.
        x_flat = jnp.pad(x_flat, ((0, pad_rows), (0, pad_cols)))

    # --- v7x: split embed dim so both TensorCores get work when grid_n == 1 --
    if two_tc and grid_n == 1 and e_pad >= 256 and e_pad % 256 == 0:
        te = e_pad // 2
    else:
        te = e_pad
    grid_e = e_pad // te

    cost = pl.CostEstimate(
        flops=2 * n_pad * k_pad * f_pad * grid_e + 2 * n_pad * f_pad * e_pad,
        transcendentals=0,
        bytes_accessed=(4 * n_pad * k_pad * grid_e
                        + 2 * k_pad * f_pad * grid_n * grid_e
                        + 2 * f_pad * e_pad + 4 * (f_pad + e_pad)
                        + 4 * n_pad * e_pad),
    )

    def _run(invariant_kwargs):
        in_specs = [
            pl.BlockSpec((tn, tk), lambda i, j, kk: (i, kk)),      # x tile
            pl.BlockSpec((tk, f_pad), lambda i, j, kk: (kk, 0)),   # w1 tile (streamed over K)
            pl.BlockSpec((1, f_pad), lambda i, j, kk: (0, 0), **invariant_kwargs),   # b1
            pl.BlockSpec((f_pad, te), lambda i, j, kk: (0, j), **invariant_kwargs),  # w2
            pl.BlockSpec((1, te), lambda i, j, kk: (0, j), **invariant_kwargs),      # b2
        ]
        return pl.pallas_call(
            _mymodel_kernel,
            out_shape=jax.ShapeDtypeStruct((n_pad, e_pad), jnp.float32),
            grid_spec=pltpu.PrefetchScalarGridSpec(
                num_scalar_prefetch=0,
                grid=(grid_n, grid_e, grid_k),                     # reduction axis last
                in_specs=in_specs,
                out_specs=pl.BlockSpec((tn, te), lambda i, j, kk: (i, j)),
                scratch_shapes=[pltpu.VMEM((tn, f_pad), jnp.float32)],  # f32 accumulator
            ),
            compiler_params=pltpu.CompilerParams(
                dimension_semantics=("parallel", "parallel", "arbitrary"),
                vmem_limit_bytes=_vmem_limit_bytes(),
            ),
            cost_estimate=cost,
        )(x_flat, params["w1_t"], params["b1"], params["w2_t"], params["b2"])

    if hasattr(pl, "Buffered"):
        try:
            out = _run({"pipeline_mode": pl.Buffered(1)})   # single-buffer invariant operands
        except Exception:
            out = _run({})                                  # fallback: default double buffering
    else:
        out = _run({})

    return out[:n, :params["e"]]


# ----------------------------------------------------------------------------
# References
# ----------------------------------------------------------------------------
def _reference_f32(x_nchw, w1, b1, w2, b2):
    n = x_nchw.shape[0]
    x_flat = x_nchw.reshape(n, -1)
    h = jnp.maximum(x_flat @ w1.T + b1, 0.0)
    return h @ w2.T + b2


def _reference_bf16(x_nchw, w1, b1, w2, b2):
    # Same bf16-operand / f32-accumulation recipe as the kernel.
    n = x_nchw.shape[0]
    x_flat = x_nchw.reshape(n, -1).astype(jnp.bfloat16)
    h = jnp.dot(x_flat, w1.T.astype(jnp.bfloat16),
                preferred_element_type=jnp.float32) + b1
    h = jnp.maximum(h, 0.0)
    return jnp.dot(h.astype(jnp.bfloat16), w2.T.astype(jnp.bfloat16),
                   preferred_element_type=jnp.float32) + b2


# ----------------------------------------------------------------------------
# Test
# ----------------------------------------------------------------------------
if __name__ == "__main__":
    # Small shapes consistent with the module's forward (NCHW input).
    N, C, H, W = 2, 4, 16, 16        # input batch
    BACKBONE_FEAT = 64               # backbone.final_feat_dim (padded to 128 internally)
    EMBED_DIM = 128                  # self.final_feat_dim (scaled-down from 512)

    key = jax.random.PRNGKey(0)
    kx, k1, k2, k3, k4 = jax.random.split(key, 5)

    x = jax.random.normal(kx, (N, C, H, W), dtype=jnp.float32)

    in1 = C * H * W
    w1 = jax.random.normal(k1, (BACKBONE_FEAT, in1), dtype=jnp.float32) * (1.0 / jnp.sqrt(in1))
    b1 = jax.random.normal(k2, (BACKBONE_FEAT,), dtype=jnp.float32) * 0.01
    w2 = jax.random.normal(k3, (EMBED_DIM, BACKBONE_FEAT), dtype=jnp.float32) * (1.0 / jnp.sqrt(BACKBONE_FEAT))
    b2 = jax.random.normal(k4, (EMBED_DIM,), dtype=jnp.float32) * 0.01

    # One-time weight prep; small tk_cap so the K-reduction pipeline (grid_k=2)
    # is actually exercised at these toy sizes.
    params = prepare_params(w1, b1, w2, b2, tk_cap=512)

    out = jax.block_until_ready(mymodel_forward(x, params))
    assert out.shape == (N, EMBED_DIM), out.shape

    # Strict check against a reference using the same bf16/f32 recipe.
    ref_bf16 = _reference_bf16(x, w1, b1, w2, b2)
    assert jnp.allclose(out, ref_bf16, atol=1e-2, rtol=1e-2), "mismatch vs bf16 reference"

    # Loose check against the pure-f32 PyTorch-equivalent forward.
    ref_f32 = _reference_f32(x, w1, b1, w2, b2)
    assert jnp.allclose(out, ref_f32, atol=5e-2, rtol=5e-2), "mismatch vs f32 reference"

    print("KERNEL_OK")
</pallas_src>

<mosaic_0001>
module attributes {stable_mosaic.version = 11 : i64} {
  func.func @_mymodel_kernel(%arg0: i32, %arg1: i32, %arg2: i32, %arg3: memref<8x512xf32, #tpu.memory_space<vmem>>, %arg4: memref<512x128xbf16, #tpu.memory_space<vmem>>, %arg5: memref<1x128xf32, #tpu.memory_space<vmem>>, %arg6: memref<128x128xbf16, #tpu.memory_space<vmem>>, %arg7: memref<1x128xf32, #tpu.memory_space<vmem>>, %arg8: memref<8x128xf32, #tpu.memory_space<vmem>>, %arg9: memref<8x128xf32, #tpu.memory_space<vmem>>) attributes {dimension_semantics = [#tpu.dimension_semantics<parallel>, #tpu.dimension_semantics<parallel>, #tpu.dimension_semantics<arbitrary>], iteration_bounds = array<i64: 1, 1, 2>, scalar_prefetch = 0 : i64, scratch_operands = 1 : i64, tpu.core_type = #tpu.core_type<tc>, window_params = [{transform_indices = @transform_0, window_bounds = array<i64: 8, 512>}, {transform_indices = @transform_1, window_bounds = array<i64: 512, 128>}, {pipeline_mode = #tpu.pipeline_mode<synchronous>, transform_indices = @transform_2, window_bounds = array<i64: 1, 128>}, {pipeline_mode = #tpu.pipeline_mode<synchronous>, transform_indices = @transform_3, window_bounds = array<i64: 128, 128>}, {pipeline_mode = #tpu.pipeline_mode<synchronous>, transform_indices = @transform_4, window_bounds = array<i64: 1, 128>}, {transform_indices = @transform_5, window_bounds = array<i64: 8, 128>}]} {
    %c0_i32 = arith.constant 0 : i32
    %0 = arith.cmpi eq, %arg2, %c0_i32 : i32
    %1 = arith.extui %0 : i1 to i32
    %c0_i32_0 = arith.constant 0 : i32
    %2 = arith.cmpi ne, %1, %c0_i32_0 : i32
    scf.if %2 {
      %cst_9 = arith.constant 0.000000e+00 : f32
      %13 = vector.broadcast %cst_9 : f32 to vector<8x128xf32>
      %c0_10 = arith.constant 0 : index
      %c0_11 = arith.constant 0 : index
      %14 = vector.load %arg9[%c0_10, %c0_11] : memref<8x128xf32, #tpu.memory_space<vmem>>, vector<8x128xf32>
      tpu.vector_store %arg9[%c0_10, %c0_11], %13 {strides = array<i32>} : memref<8x128xf32, #tpu.memory_space<vmem>>, vector<8x128xf32>,
    } else {
    }
    %c0 = arith.constant 0 : index
    %c0_1 = arith.constant 0 : index
    %3 = vector.load %arg9[%c0, %c0_1] : memref<8x128xf32, #tpu.memory_space<vmem>>, vector<8x128xf32>
    %c0_2 = arith.constant 0 : index
    %c0_3 = arith.constant 0 : index
    %4 = vector.load %arg3[%c0_2, %c0_3] : memref<8x512xf32, #tpu.memory_space<vmem>>, vector<8x512xf32>
    %5 = arith.truncf %4 : vector<8x512xf32> to vector<8x512xbf16>
    %c0_4 = arith.constant 0 : index
    %c0_5 = arith.constant 0 : index
    %6 = vector.load %arg4[%c0_4, %c0_5] : memref<512x128xbf16, #tpu.memory_space<vmem>>, vector<512x128xbf16>
    %cst = arith.constant dense<0.000000e+00> : vector<8x128xf32>
    %7 = tpu.matmul %5, %6, %cst {dimension_numbers = #tpu.dot_dimension_numbers<[1], [0], [0], [1], [0, 0, 1, 1], [], []>} : vector<8x512xbf16>, vector<512x128xbf16>, vector<8x128xf32> -> vector<8x128xf32>
    %8 = arith.addf %3, %7 : vector<8x128xf32>
    %c0_6 = arith.constant 0 : index
    %c0_7 = arith.constant 0 : index
    %9 = vector.load %arg9[%c0_6, %c0_7] : memref<8x128xf32, #tpu.memory_space<vmem>>, vector<8x128xf32>
    tpu.vector_store %arg9[%c0_6, %c0_7], %8 {strides = array<i32>} : memref<8x128xf32, #tpu.memory_space<vmem>>, vector<8x128xf32>,
    %c1_i32 = arith.constant 1 : i32
    %10 = arith.cmpi eq, %arg2, %c1_i32 : i32
    %11 = arith.extui %10 : i1 to i32
    %c0_i32_8 = arith.constant 0 : i32
    %12 = arith.cmpi ne, %11, %c0_i32_8 : i32
    scf.if %12 {
      %c0_9 = arith.constant 0 : index
      %c0_10 = arith.constant 0 : index
      %13 = vector.load %arg9[%c0_9, %c0_10] : memref<8x128xf32, #tpu.memory_space<vmem>>, vector<8x128xf32>
      %c0_11 = arith.constant 0 : index
      %c0_12 = arith.constant 0 : index
      %14 = vector.load %arg5[%c0_11, %c0_12] : memref<1x128xf32, #tpu.memory_space<vmem>>, vector<1x128xf32>
      %15 = vector.broadcast %14 : vector<1x128xf32> to vector<8x128xf32>
      %16 = arith.addf %13, %15 : vector<8x128xf32>
      %cst_13 = arith.constant 0.000000e+00 : f32
      %17 = vector.broadcast %cst_13 : f32 to vector<8x128xf32>
      %18 = arith.maximumf %16, %17 : vector<8x128xf32>
      %19 = arith.truncf %18 : vector<8x128xf32> to vector<8x128xbf16>
      %c0_14 = arith.constant 0 : index
      %c0_15 = arith.constant 0 : index
      %20 = vector.load %arg6[%c0_14, %c0_15] : memref<128x128xbf16, #tpu.memory_space<vmem>>, vector<128x128xbf16>
      %cst_16 = arith.constant dense<0.000000e+00> : vector<8x128xf32>
      %21 = tpu.matmul %19, %20, %cst_16 {dimension_numbers = #tpu.dot_dimension_numbers<[1], [0], [0], [1], [0, 0, 1, 1], [], []>} : vector<8x128xbf16>, vector<128x128xbf16>, vector<8x128xf32> -> vector<8x128xf32>
      %c0_17 = arith.constant 0 : index
      %c0_18 = arith.constant 0 : index
      %22 = vector.load %arg7[%c0_17, %c0_18] : memref<1x128xf32, #tpu.memory_space<vmem>>, vector<1x128xf32>
      %23 = vector.broadcast %22 : vector<1x128xf32> to vector<8x128xf32>
      %24 = arith.addf %21, %23 : vector<8x128xf32>
      %c0_19 = arith.constant 0 : index
      %c0_20 = arith.constant 0 : index
      %25 = vector.load %arg8[%c0_19, %c0_20] : memref<8x128xf32, #tpu.memory_space<vmem>>, vector<8x128xf32>
      tpu.vector_store %arg8[%c0_19, %c0_20], %24 {strides = array<i32>} : memref<8x128xf32, #tpu.memory_space<vmem>>, vector<8x128xf32>,
    } else {
    }
    return
  }
  func.func @transform_0(%arg0: i32, %arg1: i32, %arg2: i32) -> (i32, i32) {
    %c0_i32 = arith.constant 0 : i32
    return %arg0, %arg2 : i32, i32
  }
  func.func @transform_1(%arg0: i32, %arg1: i32, %arg2: i32) -> (i32, i32) {
    %c0_i32 = arith.constant 0 : i32
    %c0_i32_0 = arith.constant 0 : i32
    return %arg2, %c0_i32 : i32, i32
  }
  func.func @transform_2(%arg0: i32, %arg1: i32, %arg2: i32) -> (i32, i32) {
    %c0_i32 = arith.constant 0 : i32
    %c0_i32_0 = arith.constant 0 : i32
    %c0_i32_1 = arith.constant 0 : i32
    return %c0_i32, %c0_i32_0 : i32, i32
  }
  func.func @transform_3(%arg0: i32, %arg1: i32, %arg2: i32) -> (i32, i32) {
    %c0_i32 = arith.constant 0 : i32
    %c0_i32_0 = arith.constant 0 : i32
    return %c0_i32, %arg1 : i32, i32
  }
  func.func @transform_4(%arg0: i32, %arg1: i32, %arg2: i32) -> (i32, i32) {
    %c0_i32 = arith.constant 0 : i32
    %c0_i32_0 = arith.constant 0 : i32
    return %c0_i32, %arg1 : i32, i32
  }
  func.func @transform_5(%arg0: i32, %arg1: i32, %arg2: i32) -> (i32, i32) {
    %c0_i32 = arith.constant 0 : i32
    return %arg0, %arg1 : i32, i32
  }
}

module attributes {stable_mosaic.version = 11 : i64} {
  func.func @_mymodel_kernel(%arg0: i32, %arg1: i32, %arg2: i32, %arg3: memref<8x512xf32, #tpu.memory_space<vmem>>, %arg4: memref<512x128xbf16, #tpu.memory_space<vmem>>, %arg5: memref<1x128xf32, #tpu.memory_space<vmem>>, %arg6: memref<128x128xbf16, #tpu.memory_space<vmem>>, %arg7: memref<1x128xf32, #tpu.memory_space<vmem>>, %arg8: memref<8x128xf32, #tpu.memory_space<vmem>>, %arg9: memref<8x128xf32, #tpu.memory_space<vmem>>) attributes {dimension_semantics = [#tpu.dimension_semantics<parallel>, #tpu.dimension_semantics<parallel>, #tpu.dimension_semantics<arbitrary>], iteration_bounds = array<i64: 1, 1, 2>, scalar_prefetch = 0 : i64, scratch_operands = 1 : i64, tpu.core_type = #tpu.core_type<tc>, window_params = [{transform_indices = @transform_0, window_bounds = array<i64: 8, 512>}, {transform_indices = @transform_1, window_bounds = array<i64: 512, 128>}, {pipeline_mode = #tpu.pipeline_mode<synchronous>, transform_indices = @transform_2, window_bounds = array<i64: 1, 128>}, {transform_indices = @transform_3, window_bounds = array<i64: 128, 128>}, {transform_indices = @transform_4, window_bounds = array<i64: 1, 128>}, {transform_indices = @transform_5, window_bounds = array<i64: 8, 128>}]} {
    %c0_i32 = arith.constant 0 : i32
    %0 = arith.cmpi eq, %arg2, %c0_i32 : i32
    %1 = arith.extui %0 : i1 to i32
    %c0_i32_0 = arith.constant 0 : i32
    %2 = arith.cmpi ne, %1, %c0_i32_0 : i32
    scf.if %2 {
      %cst_9 = arith.constant 0.000000e+00 : f32
      %13 = vector.broadcast %cst_9 : f32 to vector<8x128xf32>
      %c0_10 = arith.constant 0 : index
      %c0_11 = arith.constant 0 : index
      %14 = vector.load %arg9[%c0_10, %c0_11] : memref<8x128xf32, #tpu.memory_space<vmem>>, vector<8x128xf32>
      tpu.vector_store %arg9[%c0_10, %c0_11], %13 {strides = array<i32>} : memref<8x128xf32, #tpu.memory_space<vmem>>, vector<8x128xf32>,
    } else {
    }
    %c0 = arith.constant 0 : index
    %c0_1 = arith.constant 0 : index
    %3 = vector.load %arg9[%c0, %c0_1] : memref<8x128xf32, #tpu.memory_space<vmem>>, vector<8x128xf32>
    %c0_2 = arith.constant 0 : index
    %c0_3 = arith.constant 0 : index
    %4 = vector.load %arg3[%c0_2, %c0_3] : memref<8x512xf32, #tpu.memory_space<vmem>>, vector<8x512xf32>
    %5 = arith.truncf %4 : vector<8x512xf32> to vector<8x512xbf16>
    %c0_4 = arith.constant 0 : index
    %c0_5 = arith.constant 0 : index
    %6 = vector.load %arg4[%c0_4, %c0_5] : memref<512x128xbf16, #tpu.memory_space<vmem>>, vector<512x128xbf16>
    %cst = arith.constant dense<0.000000e+00> : vector<8x128xf32>
    %7 = tpu.matmul %5, %6, %cst {dimension_numbers = #tpu.dot_dimension_numbers<[1], [0], [0], [1], [0, 0, 1, 1], [], []>} : vector<8x512xbf16>, vector<512x128xbf16>, vector<8x128xf32> -> vector<8x128xf32>
    %8 = arith.addf %3, %7 : vector<8x128xf32>
    %c0_6 = arith.constant 0 : index
    %c0_7 = arith.constant 0 : index
    %9 = vector.load %arg9[%c0_6, %c0_7] : memref<8x128xf32, #tpu.memory_space<vmem>>, vector<8x128xf32>
    tpu.vector_store %arg9[%c0_6, %c0_7], %8 {strides = array<i32>} : memref<8x128xf32, #tpu.memory_space<vmem>>, vector<8x128xf32>,
    %c1_i32 = arith.constant 1 : i32
    %10 = arith.cmpi eq, %arg2, %c1_i32 : i32
    %11 = arith.extui %10 : i1 to i32
    %c0_i32_8 = arith.constant 0 : i32
    %12 = arith.cmpi ne, %11, %c0_i32_8 : i32
    scf.if %12 {
      %c0_9 = arith.constant 0 : index
      %c0_10 = arith.constant 0 : index
      %13 = vector.load %arg9[%c0_9, %c0_10] : memref<8x128xf32, #tpu.memory_space<vmem>>, vector<8x128xf32>
      %c0_11 = arith.constant 0 : index
      %c0_12 = arith.constant 0 : index
      %14 = vector.load %arg5[%c0_11, %c0_12] : memref<1x128xf32, #tpu.memory_space<vmem>>, vector<1x128xf32>
      %15 = vector.broadcast %14 : vector<1x128xf32> to vector<8x128xf32>
      %16 = arith.addf %13, %15 : vector<8x128xf32>
      %cst_13 = arith.constant 0.000000e+00 : f32
      %17 = vector.broadcast %cst_13 : f32 to vector<8x128xf32>
      %18 = arith.maximumf %16, %17 : vector<8x128xf32>
      %19 = arith.truncf %18 : vector<8x128xf32> to vector<8x128xbf16>
      %c0_14 = arith.constant 0 : index
      %c0_15 = arith.constant 0 : index
      %20 = vector.load %arg6[%c0_14, %c0_15] : memref<128x128xbf16, #tpu.memory_space<vmem>>, vector<128x128xbf16>
      %cst_16 = arith.constant dense<0.000000e+00> : vector<8x128xf32>
      %21 = tpu.matmul %19, %20, %cst_16 {dimension_numbers = #tpu.dot_dimension_numbers<[1], [0], [0], [1], [0, 0, 1, 1], [], []>} : vector<8x128xbf16>, vector<128x128xbf16>, vector<8x128xf32> -> vector<8x128xf32>
      %c0_17 = arith.constant 0 : index
      %c0_18 = arith.constant 0 : index
      %22 = vector.load %arg7[%c0_17, %c0_18] : memref<1x128xf32, #tpu.memory_space<vmem>>, vector<1x128xf32>
      %23 = vector.broadcast %22 : vector<1x128xf32> to vector<8x128xf32>
      %24 = arith.addf %21, %23 : vector<8x128xf32>
      %c0_19 = arith.constant 0 : index
      %c0_20 = arith.constant 0 : index
      %25 = vector.load %arg8[%c0_19, %c0_20] : memref<8x128xf32, #tpu.memory_space<vmem>>, vector<8x128xf32>
      tpu.vector_store %arg8[%c0_19, %c0_20], %24 {strides = array<i32>} : memref<8x128xf32, #tpu.memory_space<vmem>>, vector<8x128xf32>,
    } else {
    }
    return
  }
  func.func @transform_0(%arg0: i32, %arg1: i32, %arg2: i32) -> (i32, i32) {
    %c0_i32 = arith.constant 0 : i32
    return %arg0, %arg2 : i32, i32
  }
  func.func @transform_1(%arg0: i32, %arg1: i32, %arg2: i32) -> (i32, i32) {
    %c0_i32 = arith.constant 0 : i32
    %c0_i32_0 = arith.constant 0 : i32
    return %arg2, %c0_i32 : i32, i32
  }
  func.func @transform_2(%arg0: i32, %arg1: i32, %arg2: i32) -> (i32, i32) {
    %c0_i32 = arith.constant 0 : i32
    %c0_i32_0 = arith.constant 0 : i32
    %c0_i32_1 = arith.constant 0 : i32
    return %c0_i32, %c0_i32_0 : i32, i32
  }
  func.func @transform_3(%arg0: i32, %arg1: i32, %arg2: i32) -> (i32, i32) {
    %c0_i32 = arith.constant 0 : i32
    %c0_i32_0 = arith.constant 0 : i32
    return %c0_i32, %arg1 : i32, i32
  }
  func.func @transform_4(%arg0: i32, %arg1: i32, %arg2: i32) -> (i32, i32) {
    %c0_i32 = arith.constant 0 : i32
    %c0_i32_0 = arith.constant 0 : i32
    return %c0_i32, %arg1 : i32, i32
  }
  func.func @transform_5(%arg0: i32, %arg1: i32, %arg2: i32) -> (i32, i32) {
    %c0_i32 = arith.constant 0 : i32
    return %arg0, %arg1 : i32, i32
  }
}

</mosaic_0001>

<llo_original>
// kernel: tpu_custom_call.1
$region0: #{tpu_custom_call.1}
  #allocation0 [shape = 'u32[]', space=smem, size = 0x4, offset = 0x4, fixed_abs, tag = 'smem constant byte address 0x4 - core index']
  #allocation1 [shape = 'u32[144,128]{1,0:T(1,128)}', space=vmem, size = 0x12000, scoped, tag = 'internal scratch']
  #allocation2 [shape = 'f32[8,128]{1,0:T(8,128)}', space=vmem, size = 0x1000, scoped, tag = 'scratch operand']
  %s0 = inlined_call_operand.hbm [shape: f32[8,1024], index: 0, kind: input, shape index: {}]
  %s1 = inlined_call_operand.hbm [shape: bf16[1024,128], index: 1, kind: input, shape index: {}]
  %s2 = inlined_call_operand.vmem [shape: f32[1,128], index: 2, kind: input, shape index: {}]
  %s3 = inlined_call_operand.hbm [shape: bf16[128,128], index: 3, kind: input, shape index: {}]
  %s4 = inlined_call_operand.vmem [shape: f32[1,128], index: 4, kind: input, shape index: {}]
  %s5 = inlined_call_operand.hbm [shape: f32[8,128], index: 5, kind: output, shape index: {}]
  %s6 = sld [smem:[#allocation0]]
  $region73: #{tpu_custom_call.1} parent=0
    _
  %s8 = ssub.s32 1, %s6
  %s9 = scalar_select 0, %s8, %s6
  $region1: #{tpu_custom_call.1} parent=0
    #allocation3 [shape = 'u8[32768]{0}', space=vmem, size = 0x8000, scoped, tag = 'input window, operand 0']
    #allocation4 [shape = 's32[2]{0}', space=sflag, size = 0x8, scoped, tag = 'scoped memory for tpu_custom_call.1']
    #allocation5 [shape = 's32[2]{0}', space=sflag, size = 0x8, scoped, tag = 'scoped memory for tpu_custom_call.1']
    #allocation6 [shape = 'u8[262144]{0}', space=vmem, size = 0x40000, scoped, tag = 'input window, operand 1']
    #allocation7 [shape = 's32[2]{0}', space=sflag, size = 0x8, scoped, tag = 'scoped memory for tpu_custom_call.1']
    #allocation8 [shape = 'u8[32768]{0}', space=vmem, size = 0x8000, scoped, tag = 'input window, operand 3, single buffered']
    #allocation9 [shape = 'u8[4096]{0}', space=vmem, size = 0x1000, scoped, tag = 'output window, operand 0, single buffered']
    %10 = vsyncpa [#allocation4], 0
    %s11 = scalar_lea.sflag [#allocation4], 1
    %12 = vsyncpa %s11, 0
    %13 = vsyncpa [#allocation7], 0
    %s14 = scalar_lea.sflag [#allocation7], 1
    %15 = vsyncpa %s14, 0
    %16 = vsyncpa [#allocation5], 0
    loop: start=0, step=1, limit=4
    $region2: #{tpu_custom_call.1} parent=1 // loop_pre_header
      _
    $region3: #{tpu_custom_call.1} parent=1 // loop_header
      %s18 = sphi 0, %s22
      %p19 = scmp.ge.s32.totalorder %s18, 4
      %s25 = sphi 0, %s44
      %s26 = sphi 0, %s40
      %s27 = sphi 0, %s36
      %s28 = sphi 0, %s25
      %s29 = sphi 0, %s26
      %s30 = sphi 0, %s27
      %s31 = sphi 0, %s28
      %s32 = sphi 0, %s29
      %s33 = sphi 0, %s30
      %s49 = sphi 0, %s51
      %s52 = sphi 0, %s49
      %s53 = sphi 0, %s52
      %s69 = sphi 0, %s53
      %s75 = sphi 0, %s77
      %s78 = sphi 0, %s75
      %s79 = sphi 0, %s78
      %s95 = sphi 0, %s79
      %s99 = sphi 0, %s99
      %s101 = sphi 0, %s99
      %s102 = sphi 0, %s101
      %s116 = sphi 0, %s102
      %s122 = sphi 0, %s124
      %s125 = sphi 0, %s122
      %s126 = sphi 0, %s125
      %s142 = sphi 0, %s126
      %s148 = sphi 0, %s150
      %s151 = sphi 0, %s148
      %s152 = sphi 0, %s151
      %s168 = sphi 0, %s152
      %s176 = sphi 0, %s178
      %s179 = sphi 0, %s176
      %s180 = sphi 0, %s179
      %s196 = sphi 0, %s180
    $region4: #{tpu_custom_call.1} parent=1 // loop_header_branch
      %21 = sbr.rel (%p19) target = $region8
    $region5: #{tpu_custom_call.1} parent=1 // loop_body
      %s23 = ssub.s32 %s18, 1
      %s24 = ssub.s32 %s18, 2
      %s34 = sadd.s32 1, %s27
      %p35 = scmp.ge.s32.totalorder %s34, 2
      %s36 = scalar_select %p35, 0, %s34
      %s37 = sadd.s32 1, %s26
      %s38 = scalar_select %p35, %s37, %s26
      %p39 = scmp.ge.s32.totalorder %s38, 1
      %s40 = scalar_select %p39, 0, %s38
      %s41 = sadd.s32 1, %s25
      %s42 = scalar_select %p39, %s41, %s25
      %p43 = scmp.ge.s32.totalorder %s42, 1
      %s44 = scalar_select %p43, 0, %s42
      %s45 = ssub.s32 %s25, %s44
      %s46 = ssub.s32 %s27, %s36
      %s47 = sor.u32 %s45, %s46
      %p48 = scmp.eq.s32.totalorder %s47, 0
      %s50 = sadd.s32 %s49, 1
      %s51 = scalar_select %p48, %s49, %s50
      %p54 = pneg %p48
      %p55 = scmp.eq.s32.totalorder %s18, 1
      %p56 = por %p54, %p55
      %p57 = scmp.ne.s32.totalorder %s49, %s52
      %p58 = scmp.eq.s32.totalorder %s18, 0
      %p59 = por %p57, %p58
      %p60 = scmp.ne.s32.totalorder %s49, %s52
      %p61 = scmp.eq.s32.totalorder %s23, 1
      %p62 = por %p60, %p61
      %p63 = scmp.ne.s32.totalorder %s52, %s53
      %p64 = scmp.eq.s32.totalorder %s23, 0
      %p65 = por %p63, %p64
      %p66 = scmp.ne.s32.totalorder %s52, %s53
      %p67 = scmp.eq.s32.totalorder %s24, 1
      %p68 = por %p66, %p67
      %p70 = scmp.ne.s32.totalorder %s53, %s69
      %p71 = scmp.eq.s32.totalorder %s24, 0
      %p72 = por %p70, %p71
      %s73 = ssub.s32 %s27, %s36
      %p74 = scmp.eq.s32.totalorder %s73, 0
      %s76 = sadd.s32 %s75, 1
      %s77 = scalar_select %p74, %s75, %s76
      %p80 = pneg %p74
      %p81 = scmp.eq.s32.totalorder %s18, 1
      %p82 = por %p80, %p81
      %p83 = scmp.ne.s32.totalorder %s75, %s78
      %p84 = scmp.eq.s32.totalorder %s18, 0
      %p85 = por %p83, %p84
      %p86 = scmp.ne.s32.totalorder %s75, %s78
      %p87 = scmp.eq.s32.totalorder %s23, 1
      %p88 = por %p86, %p87
      %p89 = scmp.ne.s32.totalorder %s78, %s79
      %p90 = scmp.eq.s32.totalorder %s23, 0
      %p91 = por %p89, %p90
      %p92 = scmp.ne.s32.totalorder %s78, %s79
      %p93 = scmp.eq.s32.totalorder %s24, 1
      %p94 = por %p92, %p93
      %p96 = scmp.ne.s32.totalorder %s79, %s95
      %p97 = scmp.eq.s32.totalorder %s24, 0
      %p98 = por %p96, %p97
      %s100 = sadd.s32 %s99, 1
      %p103 = scmp.eq.s32.totalorder %s18, 1
      %p104 = scmp.ne.s32.totalorder %s99, %s101
      %p105 = scmp.eq.s32.totalorder %s18, 0
      %p106 = por %p104, %p105
      %p107 = scmp.ne.s32.totalorder %s99, %s101
      %p108 = scmp.eq.s32.totalorder %s23, 1
      %p109 = por %p107, %p108
      %p110 = scmp.ne.s32.totalorder %s101, %s102
      %p111 = scmp.eq.s32.totalorder %s23, 0
      %p112 = por %p110, %p111
      %p113 = scmp.ne.s32.totalorder %s101, %s102
      %p114 = scmp.eq.s32.totalorder %s24, 1
      %p115 = por %p113, %p114
      %p117 = scmp.ne.s32.totalorder %s102, %s116
      %p118 = scmp.eq.s32.totalorder %s24, 0
      %p119 = por %p117, %p118
      %s120 = ssub.s32 %s26, %s40
      %p121 = scmp.eq.s32.totalorder %s120, 0
      %s123 = sadd.s32 %s122, 1
      %s124 = scalar_select %p121, %s122, %s123
      %p127 = pneg %p121
      %p128 = scmp.eq.s32.totalorder %s18, 1
      %p129 = por %p127, %p128
      %p130 = scmp.ne.s32.totalorder %s122, %s125
      %p131 = scmp.eq.s32.totalorder %s18, 0
      %p132 = por %p130, %p131
      %p133 = scmp.ne.s32.totalorder %s122, %s125
      %p134 = scmp.eq.s32.totalorder %s23, 1
      %p135 = por %p133, %p134
      %p136 = scmp.ne.s32.totalorder %s125, %s126
      %p137 = scmp.eq.s32.totalorder %s23, 0
      %p138 = por %p136, %p137
      %p139 = scmp.ne.s32.totalorder %s125, %s126
      %p140 = scmp.eq.s32.totalorder %s24, 1
      %p141 = por %p139, %p140
      %p143 = scmp.ne.s32.totalorder %s126, %s142
      %p144 = scmp.eq.s32.totalorder %s24, 0
      %p145 = por %p143, %p144
      %s146 = ssub.s32 %s26, %s40
      %p147 = scmp.eq.s32.totalorder %s146, 0
      %s149 = sadd.s32 %s148, 1
      %s150 = scalar_select %p147, %s148, %s149
      %p153 = pneg %p147
      %p154 = scmp.eq.s32.totalorder %s18, 1
      %p155 = por %p153, %p154
      %p156 = scmp.ne.s32.totalorder %s148, %s151
      %p157 = scmp.eq.s32.totalorder %s18, 0
      %p158 = por %p156, %p157
      %p159 = scmp.ne.s32.totalorder %s148, %s151
      %p160 = scmp.eq.s32.totalorder %s23, 1
      %p161 = por %p159, %p160
      %p162 = scmp.ne.s32.totalorder %s151, %s152
      %p163 = scmp.eq.s32.totalorder %s23, 0
      %p164 = por %p162, %p163
      %p165 = scmp.ne.s32.totalorder %s151, %s152
      %p166 = scmp.eq.s32.totalorder %s24, 1
      %p167 = por %p165, %p166
      %p169 = scmp.ne.s32.totalorder %s152, %s168
      %p170 = scmp.eq.s32.totalorder %s24, 0
      %p171 = por %p169, %p170
      %s172 = ssub.s32 %s25, %s44
      %s173 = ssub.s32 %s26, %s40
      %s174 = sor.u32 %s172, %s173
      %p175 = scmp.eq.s32.totalorder %s174, 0
      %s177 = sadd.s32 %s176, 1
      %s178 = scalar_select %p175, %s176, %s177
      %p181 = pneg %p175
      %p182 = scmp.eq.s32.totalorder %s18, 1
      %p183 = por %p181, %p182
      %p184 = scmp.ne.s32.totalorder %s176, %s179
      %p185 = scmp.eq.s32.totalorder %s18, 0
      %p186 = por %p184, %p185
      %p187 = scmp.ne.s32.totalorder %s176, %s179
      %p188 = scmp.eq.s32.totalorder %s23, 1
      %p189 = por %p187, %p188
      %p190 = scmp.ne.s32.totalorder %s179, %s180
      %p191 = scmp.eq.s32.totalorder %s23, 0
      %p192 = por %p190, %p191
      %p193 = scmp.ne.s32.totalorder %s179, %s180
      %p194 = scmp.eq.s32.totalorder %s24, 1
      %p195 = por %p193, %p194
      %p197 = scmp.ne.s32.totalorder %s180, %s196
      %p198 = scmp.eq.s32.totalorder %s24, 0
      %p199 = por %p197, %p198
      %p200 = scmp.le.s32.totalorder 1, %s18
      %p201 = scmp.lt.s32.totalorder %s18, 3
      %p202 = pnand %p200, %p201
      %p203 = pneg %p202
      // Predicated region
      $region9: #{tpu_custom_call.1} parent=5 // pred_check
        _
      $region10: #{tpu_custom_call.1} parent=5 // pred_check_branch
        %205 = sbr.rel (%p202) target = $region12
      $region11: #{tpu_custom_call.1} parent=5 // pred_region
        %s206 = ssub.s32 %s18, 1
        // Predicated region
        $region13: #{tpu_custom_call.1} parent=11 // pred_check
          %p207 = pneg %p112
        $region14: #{tpu_custom_call.1} parent=11 // pred_check_branch
          %209 = sbr.rel (%p207) target = $region16
        $region15: #{tpu_custom_call.1} parent=11 // pred_region
          _
        $region16: #{tpu_custom_call.1} parent=11 // pred_fallthru
          _
        // Predicated region
        $region17: #{tpu_custom_call.1} parent=11 // pred_check
          %p210 = pneg %p138
        $region18: #{tpu_custom_call.1} parent=11 // pred_check_branch
          %212 = sbr.rel (%p210) target = $region20
        $region19: #{tpu_custom_call.1} parent=11 // pred_region
          %s214 = ssub.s32 1024, 1024
          %215 = vsyncadd [#allocation7], %s214
          %s216 = smul.addr %s29, 64
          %s217 = scalar_lea.hbm %s3, %s216
          %s218 = sshll.u32 [#allocation8], 4
          %s219 = int_to_ptr.vmem [resolvable:$true] %s218
          %224 = dma.hbm_to_vmem [thread:$0]  %s217, 1024, %s219, [#allocation7], 64, 64, 4
        $region20: #{tpu_custom_call.1} parent=11 // pred_fallthru
          _
        // Predicated region
        $region21: #{tpu_custom_call.1} parent=11 // pred_check
          %p225 = pneg %p164
        $region22: #{tpu_custom_call.1} parent=11 // pred_check_branch
          %227 = sbr.rel (%p225) target = $region24
        $region23: #{tpu_custom_call.1} parent=11 // pred_region
          %p228 = scmp.lt.s32.totalorder %s29, 0
          %s229 = scalar_select %p228, %s29, 0
          %s230 = scalar_lea.vmem %s4, %s229
        $region24: #{tpu_custom_call.1} parent=11 // pred_fallthru
          _
      $region12: #{tpu_custom_call.1} parent=5 // pred_fallthru
        _
      %p231 = scmp.lt.s32.totalorder %s18, 2
      // Predicated region
      $region25: #{tpu_custom_call.1} parent=5 // pred_check
        %p232 = pneg %p231
      $region26: #{tpu_custom_call.1} parent=5 // pred_check_branch
        %234 = sbr.rel (%p232) target = $region28
      $region27: #{tpu_custom_call.1} parent=5 // pred_region
        // Predicated region
        $region29: #{tpu_custom_call.1} parent=27 // pred_check
          %p235 = pneg %p59
        $region30: #{tpu_custom_call.1} parent=27 // pred_check_branch
          %237 = sbr.rel (%p235) target = $region32
        $region31: #{tpu_custom_call.1} parent=27 // pred_region
          %s238 = sand.u32 %s49, 1
          %s239 = scalar_lea.sflag [#allocation4], %s238
          %s240 = sand.u32 %s49, 1
          %s241 = smul.addr %s240, 32
          %s242 = scalar_lea.vmem [#allocation3], %s241
          %s243 = smul.u32 4, %s27
          %s245 = ssub.s32 512, 512
          %246 = vsyncadd %s239, %s245
          %s247 = smul.addr %s25, 8
          %s248 = sadd.s32 %s243, %s247
          %s249 = smul.addr %s248, 128
          %s250 = scalar_lea.hbm %s0, %s249
          %s252 = sshll.u32 %s242, 4
          %s253 = int_to_ptr.vmem [resolvable:$true] %s252
          %255 = dma.hbm_to_vmem [thread:$0]  %s250, 512, %s253, %s239
        $region32: #{tpu_custom_call.1} parent=27 // pred_fallthru
          _
        // Predicated region
        $region33: #{tpu_custom_call.1} parent=27 // pred_check
          %p256 = pneg %p85
        $region34: #{tpu_custom_call.1} parent=27 // pred_check_branch
          %258 = sbr.rel (%p256) target = $region36
        $region35: #{tpu_custom_call.1} parent=27 // pred_region
          %s259 = sand.u32 %s18, 1
          %s260 = scalar_lea.sflag [#allocation7], %s259
          %s261 = sand.u32 %s75, 1
          %s262 = smul.addr %s261, 256
          %s263 = scalar_lea.vmem [#allocation6], %s262
          %s264 = smul.u32 64, %s27
          %s266 = ssub.s32 4096, 4096
          %267 = vsyncadd %s260, %s266
          %s268 = smul.addr %s264, 64
          %s269 = scalar_lea.hbm %s1, %s268
          %s270 = sshll.u32 %s263, 4
          %s271 = int_to_ptr.vmem [resolvable:$true] %s270
          %276 = dma.hbm_to_vmem [thread:$0]  %s269, 4096, %s271, %s260, 64, 64, 4
        $region36: #{tpu_custom_call.1} parent=27 // pred_fallthru
          _
      $region28: #{tpu_custom_call.1} parent=5 // pred_fallthru
        _
      %p277 = scmp.le.s32.totalorder 1, %s18
      %p278 = scmp.lt.s32.totalorder %s18, 3
      %p279 = pnand %p277, %p278
      %p280 = pneg %p279
      // Predicated region
      $region37: #{tpu_custom_call.1} parent=5 // pred_check
        _
      $region38: #{tpu_custom_call.1} parent=5 // pred_check_branch
        %282 = sbr.rel (%p279) target = $region40
      $region39: #{tpu_custom_call.1} parent=5 // pred_region
        %s283 = ssub.s32 %s18, 1
        %s284 = sand.u32 %s52, 1
        %s285 = scalar_lea.sflag [#allocation4], %s284
        %s286 = sand.u32 %s52, 1
        %s287 = smul.addr %s286, 32
        %s288 = scalar_lea.vmem [#allocation3], %s287
        // Predicated region
        $region41: #{tpu_custom_call.1} parent=39 // pred_check
          %p289 = pneg %p65
        $region42: #{tpu_custom_call.1} parent=39 // pred_check_branch
          %291 = sbr.rel (%p289) target = $region44
        $region43: #{tpu_custom_call.1} parent=39 // pred_region
          %292 = dma.done %s285, 512
        $region44: #{tpu_custom_call.1} parent=39 // pred_fallthru
          _
        %s293 = sand.u32 %s23, 1
        %s294 = scalar_lea.sflag [#allocation7], %s293
        %s295 = sand.u32 %s78, 1
        %s296 = smul.addr %s295, 256
        %s297 = scalar_lea.vmem [#allocation6], %s296
        // Predicated region
        $region45: #{tpu_custom_call.1} parent=39 // pred_check
          %p298 = pneg %p91
        $region46: #{tpu_custom_call.1} parent=39 // pred_check_branch
          %300 = sbr.rel (%p298) target = $region48
        $region47: #{tpu_custom_call.1} parent=39 // pred_region
          %301 = dma.done %s294, 4096
        $region48: #{tpu_custom_call.1} parent=39 // pred_fallthru
          _
        // Predicated region
        $region49: #{tpu_custom_call.1} parent=39 // pred_check
          %p302 = pneg %p138
        $region50: #{tpu_custom_call.1} parent=39 // pred_check_branch
          %304 = sbr.rel (%p302) target = $region52
        $region51: #{tpu_custom_call.1} parent=39 // pred_region
          %305 = dma.done [#allocation7], 1024
        $region52: #{tpu_custom_call.1} parent=39 // pred_fallthru
          _
        %s306 = sand.u32 %s52, 1
        %s307 = scalar_lea.sflag [#allocation4], %s306
        %s308 = sand.u32 %s52, 1
        %s309 = smul.addr %s308, 32
        %s310 = scalar_lea.vmem [#allocation3], %s309
        %p311 = pneg %p65
        %p312 = pneg %p62
        %s313 = sand.u32 %s23, 1
        %s314 = scalar_lea.sflag [#allocation7], %s313
        %s315 = sand.u32 %s78, 1
        %s316 = smul.addr %s315, 256
        %s317 = scalar_lea.vmem [#allocation6], %s316
        %p318 = pneg %p91
        %p319 = pneg %p88
        %p320 = pneg %p112
        %p321 = pneg %p109
        %p322 = pneg %p138
        %p323 = pneg %p135
        %p324 = scmp.lt.s32.totalorder %s29, 0
        %s325 = scalar_select %p324, %s29, 0
        %s326 = scalar_lea.vmem %s4, %s325
        %p327 = pneg %p164
        %p328 = pneg %p161
        %p329 = pneg %p192
        %p330 = pneg %p189
        %s331 = smul.u32 4, %s30
        %s332 = smul.u32 64, %s30
        %p333 = scmp.lt.s32.totalorder %s29, 0
        %s334 = scalar_select %p333, %s29, 0
        %s335 = scalar_lea.vmem %s4, %s334
        %p337 = scmp.eq.s32.totalorder %s30, 0
        // Predicated region
        $region53: #{tpu_custom_call.1} parent=39 // pred_check
          %p338 = pneg %p337
        $region54: #{tpu_custom_call.1} parent=39 // pred_check_branch
          %340 = sbr.rel (%p338) target = $region56
        $region55: #{tpu_custom_call.1} parent=39 // pred_region
          %341 = vst [vmem:[#allocation2] sm:$0xff] 0.0
        $region56: #{tpu_custom_call.1} parent=39 // pred_fallthru
          _
        %v342 = vld [vmem:[#allocation2] sm:$0xff]
        %v343 = vld [vmem:[%s288] sm:$0xff]
        %v344 = vld [vmem:[%s288 + $0x8] sm:$0xff]
        %v345 = vld [vmem:[%s288 + $0x10] sm:$0xff]
        %v346 = vld [vmem:[%s288 + $0x18] sm:$0xff]
        %v347 = vpack.c.bf16 %v343, %v343
        %v348 = vpack.c.bf16 %v344, %v344
        %v349 = vpack.c.bf16 %v345, %v345
        %v350 = vpack.c.bf16 %v346, %v346
        %v351 = vld [vmem:[%s297] sm:$0xf]
        %v352 = vld [vmem:[%s297 + $0x4] sm:$0xf]
        %v353 = vld [vmem:[%s297 + $0x8] sm:$0xf]
        %v354 = vld [vmem:[%s297 + $0xc] sm:$0xf]
        %v355 = vld [vmem:[%s297 + $0x10] sm:$0xf]
        %v356 = vld [vmem:[%s297 + $0x14] sm:$0xf]
        %v357 = vld [vmem:[%s297 + $0x18] sm:$0xf]
        %v358 = vld [vmem:[%s297 + $0x1c] sm:$0xf]
        %v359 = vld [vmem:[%s297 + $0x20] sm:$0xf]
        %v360 = vld [vmem:[%s297 + $0x24] sm:$0xf]
        %v361 = vld [vmem:[%s297 + $0x28] sm:$0xf]
        %v362 = vld [vmem:[%s297 + $0x2c] sm:$0xf]
        %v363 = vld [vmem:[%s297 + $0x30] sm:$0xf]
        %v364 = vld [vmem:[%s297 + $0x34] sm:$0xf]
        %v365 = vld [vmem:[%s297 + $0x38] sm:$0xf]
        %v366 = vld [vmem:[%s297 + $0x3c] sm:$0xf]
        %v367 = vld [vmem:[%s297 + $0x40] sm:$0xf]
        %v368 = vld [vmem:[%s297 + $0x44] sm:$0xf]
        %v369 = vld [vmem:[%s297 + $0x48] sm:$0xf]
        %v370 = vld [vmem:[%s297 + $0x4c] sm:$0xf]
        %v371 = vld [vmem:[%s297 + $0x50] sm:$0xf]
        %v372 = vld [vmem:[%s297 + $0x54] sm:$0xf]
        %v373 = vld [vmem:[%s297 + $0x58] sm:$0xf]
        %v374 = vld [vmem:[%s297 + $0x5c] sm:$0xf]
        %v375 = vld [vmem:[%s297 + $0x60] sm:$0xf]
        %v376 = vld [vmem:[%s297 + $0x64] sm:$0xf]
        %v377 = vld [vmem:[%s297 + $0x68] sm:$0xf]
        %v378 = vld [vmem:[%s297 + $0x6c] sm:$0xf]
        %v379 = vld [vmem:[%s297 + $0x70] sm:$0xf]
        %v380 = vld [vmem:[%s297 + $0x74] sm:$0xf]
        %v381 = vld [vmem:[%s297 + $0x78] sm:$0xf]
        %v382 = vld [vmem:[%s297 + $0x7c] sm:$0xf]
        %v383 = vld [vmem:[%s297 + $0x80] sm:$0xf]
        %v384 = vld [vmem:[%s297 + $0x84] sm:$0xf]
        %v385 = vld [vmem:[%s297 + $0x88] sm:$0xf]
        %v386 = vld [vmem:[%s297 + $0x8c] sm:$0xf]
        %v387 = vld [vmem:[%s297 + $0x90] sm:$0xf]
        %v388 = vld [vmem:[%s297 + $0x94] sm:$0xf]
        %v389 = vld [vmem:[%s297 + $0x98] sm:$0xf]
        %v390 = vld [vmem:[%s297 + $0x9c] sm:$0xf]
        %v391 = vld [vmem:[%s297 + $0xa0] sm:$0xf]
        %v392 = vld [vmem:[%s297 + $0xa4] sm:$0xf]
        %v393 = vld [vmem:[%s297 + $0xa8] sm:$0xf]
        %v394 = vld [vmem:[%s297 + $0xac] sm:$0xf]
        %v395 = vld [vmem:[%s297 + $0xb0] sm:$0xf]
        %v396 = vld [vmem:[%s297 + $0xb4] sm:$0xf]
        %v397 = vld [vmem:[%s297 + $0xb8] sm:$0xf]
        %v398 = vld [vmem:[%s297 + $0xbc] sm:$0xf]
        %v399 = vld [vmem:[%s297 + $0xc0] sm:$0xf]
        %v400 = vld [vmem:[%s297 + $0xc4] sm:$0xf]
        %v401 = vld [vmem:[%s297 + $0xc8] sm:$0xf]
        %v402 = vld [vmem:[%s297 + $0xcc] sm:$0xf]
        %v403 = vld [vmem:[%s297 + $0xd0] sm:$0xf]
        %v404 = vld [vmem:[%s297 + $0xd4] sm:$0xf]
        %v405 = vld [vmem:[%s297 + $0xd8] sm:$0xf]
        %v406 = vld [vmem:[%s297 + $0xdc] sm:$0xf]
        %v407 = vld [vmem:[%s297 + $0xe0] sm:$0xf]
        %v408 = vld [vmem:[%s297 + $0xe4] sm:$0xf]
        %v409 = vld [vmem:[%s297 + $0xe8] sm:$0xf]
        %v410 = vld [vmem:[%s297 + $0xec] sm:$0xf]
        %v411 = vld [vmem:[%s297 + $0xf0] sm:$0xf]
        %v412 = vld [vmem:[%s297 + $0xf4] sm:$0xf]
        %v413 = vld [vmem:[%s297 + $0xf8] sm:$0xf]
        %v414 = vld [vmem:[%s297 + $0xfc] sm:$0xf]
        %v479 = vunpack.c.l.b16 %v351
        %v480 = vunpack.c.l.b16 %v352
        %v481 = vunpack.c.l.b16 %v353
        %v482 = vunpack.c.l.b16 %v354
        %v483 = vunpack.c.l.b16 %v355
        %v484 = vunpack.c.l.b16 %v356
        %v485 = vunpack.c.l.b16 %v357
        %v486 = vunpack.c.l.b16 %v358
        %v487 = vunpack.c.l.b16 %v359
        %v488 = vunpack.c.l.b16 %v360
        %v489 = vunpack.c.l.b16 %v361
        %v490 = vunpack.c.l.b16 %v362
        %v491 = vunpack.c.l.b16 %v363
        %v492 = vunpack.c.l.b16 %v364
        %v493 = vunpack.c.l.b16 %v365
        %v494 = vunpack.c.l.b16 %v366
        %v495 = vunpack.c.l.b16 %v367
        %v496 = vunpack.c.l.b16 %v368
        %v497 = vunpack.c.l.b16 %v369
        %v498 = vunpack.c.l.b16 %v370
        %v499 = vunpack.c.l.b16 %v371
        %v500 = vunpack.c.l.b16 %v372
        %v501 = vunpack.c.l.b16 %v373
        %v502 = vunpack.c.l.b16 %v374
        %v503 = vunpack.c.l.b16 %v375
        %v504 = vunpack.c.l.b16 %v376
        %v505 = vunpack.c.l.b16 %v377
        %v506 = vunpack.c.l.b16 %v378
        %v507 = vunpack.c.l.b16 %v379
        %v508 = vunpack.c.l.b16 %v380
        %v509 = vunpack.c.l.b16 %v381
        %v510 = vunpack.c.l.b16 %v382
        %v511 = vunpack.c.l.b16 %v383
        %v512 = vunpack.c.l.b16 %v384
        %v513 = vunpack.c.l.b16 %v385
        %v514 = vunpack.c.l.b16 %v386
        %v515 = vunpack.c.l.b16 %v387
        %v516 = vunpack.c.l.b16 %v388
        %v517 = vunpack.c.l.b16 %v389
        %v518 = vunpack.c.l.b16 %v390
        %v519 = vunpack.c.l.b16 %v391
        %v520 = vunpack.c.l.b16 %v392
        %v521 = vunpack.c.l.b16 %v393
        %v522 = vunpack.c.l.b16 %v394
        %v523 = vunpack.c.l.b16 %v395
        %v524 = vunpack.c.l.b16 %v396
        %v525 = vunpack.c.l.b16 %v397
        %v526 = vunpack.c.l.b16 %v398
        %v527 = vunpack.c.l.b16 %v399
        %v528 = vunpack.c.l.b16 %v400
        %v529 = vunpack.c.l.b16 %v401
        %v530 = vunpack.c.l.b16 %v402
        %v531 = vunpack.c.l.b16 %v403
        %v532 = vunpack.c.l.b16 %v404
        %v533 = vunpack.c.l.b16 %v405
        %v534 = vunpack.c.l.b16 %v406
        %v535 = vunpack.c.l.b16 %v407
        %v536 = vunpack.c.l.b16 %v408
        %v537 = vunpack.c.l.b16 %v409
        %v538 = vunpack.c.l.b16 %v410
        %v539 = vunpack.c.l.b16 %v411
        %v540 = vunpack.c.l.b16 %v412
        %v541 = vunpack.c.l.b16 %v413
        %v542 = vunpack.c.l.b16 %v414
        %v543 = vpack.c.b16 %v480, %v479
        %v544 = vpack.c.b16 %v482, %v481
        %v545 = vpack.c.b16 %v484, %v483
        %v546 = vpack.c.b16 %v486, %v485
        %v547 = vpack.c.b16 %v488, %v487
        %v548 = vpack.c.b16 %v490, %v489
        %v549 = vpack.c.b16 %v492, %v491
        %v550 = vpack.c.b16 %v494, %v493
        %v551 = vpack.c.b16 %v496, %v495
        %v552 = vpack.c.b16 %v498, %v497
        %v553 = vpack.c.b16 %v500, %v499
        %v554 = vpack.c.b16 %v502, %v501
        %v555 = vpack.c.b16 %v504, %v503
        %v556 = vpack.c.b16 %v506, %v505
        %v557 = vpack.c.b16 %v508, %v507
        %v558 = vpack.c.b16 %v510, %v509
        %v559 = vpack.c.b16 %v512, %v511
        %v560 = vpack.c.b16 %v514, %v513
        %v561 = vpack.c.b16 %v516, %v515
        %v562 = vpack.c.b16 %v518, %v517
        %v563 = vpack.c.b16 %v520, %v519
        %v564 = vpack.c.b16 %v522, %v521
        %v565 = vpack.c.b16 %v524, %v523
        %v566 = vpack.c.b16 %v526, %v525
        %v567 = vpack.c.b16 %v528, %v527
        %v568 = vpack.c.b16 %v530, %v529
        %v569 = vpack.c.b16 %v532, %v531
        %v570 = vpack.c.b16 %v534, %v533
        %v571 = vpack.c.b16 %v536, %v535
        %v572 = vpack.c.b16 %v538, %v537
        %v573 = vpack.c.b16 %v540, %v539
        %v574 = vpack.c.b16 %v542, %v541
        %607 = vmatprep.subr.bf16.mxu0 0
        %608 = vmatpush1.bf16.msra.mxu0 %v543
        %609 = vmatprep.subr.bf16.mxu0 0
        %610 = vmatpush1.bf16.msra.mxu0 %v544
        %611 = vmatprep.subr.bf16.mxu0 0
        %612 = vmatpush1.bf16.msra.mxu0 %v545
        %613 = vmatprep.subr.bf16.mxu0 0
        %614 = vmatpush1.bf16.msra.mxu0 %v546
        %615 = vmatprep.subr.bf16.mxu0 0
        %616 = vmatpush1.bf16.msra.mxu0 %v547
        %617 = vmatprep.subr.bf16.mxu0 0
        %618 = vmatpush1.bf16.msra.mxu0 %v548
        %619 = vmatprep.subr.bf16.mxu0 0
        %620 = vmatpush1.bf16.msra.mxu0 %v549
        %621 = vmatprep.subr.bf16.mxu0 0
        %622 = vmatpush1.bf16.msra.mxu0 %v550
        %623 = vmatprep.subr.bf16.mxu0 0
        %624 = vmatpush1.bf16.msra.mxu0 %v551
        %625 = vmatprep.subr.bf16.mxu0 0
        %626 = vmatpush1.bf16.msra.mxu0 %v552
        %627 = vmatprep.subr.bf16.mxu0 0
        %628 = vmatpush1.bf16.msra.mxu0 %v553
        %629 = vmatprep.subr.bf16.mxu0 0
        %630 = vmatpush1.bf16.msra.mxu0 %v554
        %631 = vmatprep.subr.bf16.mxu0 0
        %632 = vmatpush1.bf16.msra.mxu0 %v555
        %633 = vmatprep.subr.bf16.mxu0 0
        %634 = vmatpush1.bf16.msra.mxu0 %v556
        %635 = vmatprep.subr.bf16.mxu0 0
        %636 = vmatpush1.bf16.msra.mxu0 %v557
        %637 = vmatprep.subr.bf16.mxu0 0
        %638 = vmatpush1.bf16.msra.mxu0 %v558
        %639 = vmatprep.mubr.bf16.mxu0 %v348
        %640 = vmatmul.mubr.bf16.gmra.mrb[0].mxu0 %v347
        %v641 = vpop.f32.mrb[0].mxu0
        %v642 = vadd.f32 0.0, %v641
        %v643 = vpop.f32.mrb[0].mxu0
        %v644 = vpop.f32.mrb[0].mxu0
        %v645 = vpop.f32.mrb[0].mxu0
        %646 = vdwg.mxu0
        %647 = vmatprep.subr.bf16.mxu0 0
        %648 = vmatpush1.bf16.msra.mxu0 %v559
        %649 = vmatprep.subr.bf16.mxu0 0
        %650 = vmatpush1.bf16.msra.mxu0 %v560
        %651 = vmatprep.subr.bf16.mxu0 0
        %652 = vmatpush1.bf16.msra.mxu0 %v561
        %653 = vmatprep.subr.bf16.mxu0 0
        %654 = vmatpush1.bf16.msra.mxu0 %v562
        %655 = vmatprep.subr.bf16.mxu0 0
        %656 = vmatpush1.bf16.msra.mxu0 %v563
        %657 = vmatprep.subr.bf16.mxu0 0
        %658 = vmatpush1.bf16.msra.mxu0 %v564
        %659 = vmatprep.subr.bf16.mxu0 0
        %660 = vmatpush1.bf16.msra.mxu0 %v565
        %661 = vmatprep.subr.bf16.mxu0 0
        %662 = vmatpush1.bf16.msra.mxu0 %v566
        %663 = vmatprep.subr.bf16.mxu0 0
        %664 = vmatpush1.bf16.msra.mxu0 %v567
        %665 = vmatprep.subr.bf16.mxu0 0
        %666 = vmatpush1.bf16.msra.mxu0 %v568
        %667 = vmatprep.subr.bf16.mxu0 0
        %668 = vmatpush1.bf16.msra.mxu0 %v569
        %669 = vmatprep.subr.bf16.mxu0 0
        %670 = vmatpush1.bf16.msra.mxu0 %v570
        %671 = vmatprep.subr.bf16.mxu0 0
        %672 = vmatpush1.bf16.msra.mxu0 %v571
        %673 = vmatprep.subr.bf16.mxu0 0
        %674 = vmatpush1.bf16.msra.mxu0 %v572
        %675 = vmatprep.subr.bf16.mxu0 0
        %676 = vmatpush1.bf16.msra.mxu0 %v573
        %677 = vmatprep.subr.bf16.mxu0 0
        %678 = vmatpush1.bf16.msra.mxu0 %v574
        %679 = vmatprep.mubr.bf16.mxu0 %v350
        %680 = vmatmul.mubr.bf16.gmra.mrb[0].mxu0 %v349
        %v681 = vpop.f32.mrb[0].mxu0
        %v682 = vadd.f32 %v642, %v681
        %v683 = vpop.f32.mrb[0].mxu0
        %v684 = vpop.f32.mrb[0].mxu0
        %v685 = vpop.f32.mrb[0].mxu0
        %686 = vdwg.mxu0
        %v687 = vadd.f32 %v342, %v682
        %688 = vst [vmem:[#allocation2] sm:$0xff] %v687
        %p689 = scmp.eq.s32.totalorder %s30, 1
        // Predicated region
        $region57: #{tpu_custom_call.1} parent=39 // pred_check
          %p690 = pneg %p689
        $region58: #{tpu_custom_call.1} parent=39 // pred_check_branch
          %692 = sbr.rel (%p690) target = $region60
        $region59: #{tpu_custom_call.1} parent=39 // pred_region
          %v693 = vld [vmem:[#allocation2] sm:$0xff]
          %v694 = vld [vmem:[%s2] sm:$0x1]
          %v696 = vlaneseq
          %v697 = vshrl.u32 %v696, 7
          %v698 = vsub.s32 0, %v697
          %v699 = vrot.slane %v694, %v698
          %v701 = vadd.f32 %v693, %v699
          %v702 = vmax.f32 %v701, 0.0
          %v703 = vpack.c.bf16 %v702, %v702
          %v704 = vld [vmem:[#allocation8] sm:$0xf]
          %v705 = vld [vmem:[#allocation8 + $0x4] sm:$0xf]
          %v706 = vld [vmem:[#allocation8 + $0x8] sm:$0xf]
          %v707 = vld [vmem:[#allocation8 + $0xc] sm:$0xf]
          %v708 = vld [vmem:[#allocation8 + $0x10] sm:$0xf]
          %v709 = vld [vmem:[#allocation8 + $0x14] sm:$0xf]
          %v710 = vld [vmem:[#allocation8 + $0x18] sm:$0xf]
          %v711 = vld [vmem:[#allocation8 + $0x1c] sm:$0xf]
          %v712 = vld [vmem:[#allocation8 + $0x20] sm:$0xf]
          %v713 = vld [vmem:[#allocation8 + $0x24] sm:$0xf]
          %v714 = vld [vmem:[#allocation8 + $0x28] sm:$0xf]
          %v715 = vld [vmem:[#allocation8 + $0x2c] sm:$0xf]
          %v716 = vld [vmem:[#allocation8 + $0x30] sm:$0xf]
          %v717 = vld [vmem:[#allocation8 + $0x34] sm:$0xf]
          %v718 = vld [vmem:[#allocation8 + $0x38] sm:$0xf]
          %v719 = vld [vmem:[#allocation8 + $0x3c] sm:$0xf]
          %v720 = vld [vmem:[%s335] sm:$0x1]
          %v722 = vlaneseq
          %v723 = vshrl.u32 %v722, 7
          %v724 = vsub.s32 0, %v723
          %v725 = vrot.slane %v720, %v724
          %v743 = vunpack.c.l.b16 %v704
          %v744 = vunpack.c.l.b16 %v705
          %v745 = vunpack.c.l.b16 %v706
          %v746 = vunpack.c.l.b16 %v707
          %v747 = vunpack.c.l.b16 %v708
          %v748 = vunpack.c.l.b16 %v709
          %v749 = vunpack.c.l.b16 %v710
          %v750 = vunpack.c.l.b16 %v711
          %v751 = vunpack.c.l.b16 %v712
          %v752 = vunpack.c.l.b16 %v713
          %v753 = vunpack.c.l.b16 %v714
          %v754 = vunpack.c.l.b16 %v715
          %v755 = vunpack.c.l.b16 %v716
          %v756 = vunpack.c.l.b16 %v717
          %v757 = vunpack.c.l.b16 %v718
          %v758 = vunpack.c.l.b16 %v719
          %v759 = vpack.c.b16 %v744, %v743
          %v760 = vpack.c.b16 %v746, %v745
          %v761 = vpack.c.b16 %v748, %v747
          %v762 = vpack.c.b16 %v750, %v749
          %v763 = vpack.c.b16 %v752, %v751
          %v764 = vpack.c.b16 %v754, %v753
          %v765 = vpack.c.b16 %v756, %v755
          %v766 = vpack.c.b16 %v758, %v757
          %775 = vmatprep.subr.bf16.mxu0 0
          %776 = vmatpush1.bf16.msra.mxu0 %v759
          %777 = vmatprep.subr.bf16.mxu0 0
          %778 = vmatpush1.bf16.msra.mxu0 %v760
          %779 = vmatprep.subr.bf16.mxu0 0
          %780 = vmatpush1.bf16.msra.mxu0 %v761
          %781 = vmatprep.subr.bf16.mxu0 0
          %782 = vmatpush1.bf16.msra.mxu0 %v762
          %783 = vmatprep.subr.bf16.mxu0 0
          %784 = vmatpush1.bf16.msra.mxu0 %v763
          %785 = vmatprep.subr.bf16.mxu0 0
          %786 = vmatpush1.bf16.msra.mxu0 %v764
          %787 = vmatprep.subr.bf16.mxu0 0
          %788 = vmatpush1.bf16.msra.mxu0 %v765
          %789 = vmatprep.subr.bf16.mxu0 0
          %790 = vmatpush1.bf16.msra.mxu0 %v766
          %791 = vmatprep.subr.bf16.mxu0 0
          %792 = vmatpush1.bf16.msra.mxu0 0
          %793 = vmatprep.subr.bf16.mxu0 0
          %794 = vmatpush1.bf16.msra.mxu0 0
          %795 = vmatprep.subr.bf16.mxu0 0
          %796 = vmatpush1.bf16.msra.mxu0 0
          %797 = vmatprep.subr.bf16.mxu0 0
          %798 = vmatpush1.bf16.msra.mxu0 0
          %799 = vmatprep.subr.bf16.mxu0 0
          %800 = vmatpush1.bf16.msra.mxu0 0
          %801 = vmatprep.subr.bf16.mxu0 0
          %802 = vmatpush1.bf16.msra.mxu0 0
          %803 = vmatprep.subr.bf16.mxu0 0
          %804 = vmatpush1.bf16.msra.mxu0 0
          %805 = vmatprep.subr.bf16.mxu0 0
          %806 = vmatpush1.bf16.msra.mxu0 0
          %807 = vmatprep.mubr.bf16.mxu0 0
          %808 = vmatmul.mubr.bf16.gmra.mrb[0].mxu0 %v703
          %v809 = vpop.f32.mrb[0].mxu0
          %v810 = vadd.f32 %v725, %v809
          %v811 = vpop.f32.mrb[0].mxu0
          %v812 = vpop.f32.mrb[0].mxu0
          %v813 = vpop.f32.mrb[0].mxu0
          %814 = vdwg.mxu0
          %815 = vst [vmem:[#allocation9] sm:$0xff] %v810
        $region60: #{tpu_custom_call.1} parent=39 // pred_fallthru
          _
        // Predicated region
        $region61: #{tpu_custom_call.1} parent=39 // pred_check
          %p816 = pneg %p189
        $region62: #{tpu_custom_call.1} parent=39 // pred_check_branch
          %818 = sbr.rel (%p816) target = $region64
        $region63: #{tpu_custom_call.1} parent=39 // pred_region
          %s820 = ssub.s32 128, 128
          %821 = vsyncadd [#allocation5], %s820
          %s822 = sadd.s32 %s29, %s28
          %s823 = smul.addr %s822, 128
          %s824 = scalar_lea.hbm %s5, %s823
          %s826 = sshll.u32 [#allocation9], 4
          %s827 = int_to_ptr.vmem [resolvable:$true] %s826
          %829 = dma.vmem_to_hbm [thread:$0]  %s827, 128, %s824, [#allocation5]
        $region64: #{tpu_custom_call.1} parent=39 // pred_fallthru
          _
        // Predicated region
        $region65: #{tpu_custom_call.1} parent=39 // pred_check
          %p830 = pneg %p189
        $region66: #{tpu_custom_call.1} parent=39 // pred_check_branch
          %832 = sbr.rel (%p830) target = $region68
        $region67: #{tpu_custom_call.1} parent=39 // pred_region
          %833 = dma.done [#allocation5], 128
        $region68: #{tpu_custom_call.1} parent=39 // pred_fallthru
          _
      $region40: #{tpu_custom_call.1} parent=5 // pred_fallthru
        _
      %p834 = scmp.le.s32.totalorder 2, %s18
      // Predicated region
      $region69: #{tpu_custom_call.1} parent=5 // pred_check
        %p835 = pneg %p834
      $region70: #{tpu_custom_call.1} parent=5 // pred_check_branch
        %837 = sbr.rel (%p835) target = $region72
      $region71: #{tpu_custom_call.1} parent=5 // pred_region
        %s838 = ssub.s32 %s18, 2
      $region72: #{tpu_custom_call.1} parent=5 // pred_fallthru
        _
    $region6: #{tpu_custom_call.1} parent=1 // loop_footer
      %s22 = sadd.s32 1, %s18
    $region7: #{tpu_custom_call.1} parent=1 // loop_footer_branch
      %17 = sbr.rel target = $region3
    $region8: #{tpu_custom_call.1} parent=1 // loop_exit
      _
    %839 = vsyncpa [#allocation4], 1
    %s840 = scalar_lea.sflag [#allocation4], 1
    %841 = vsyncpa %s840, 1
    %842 = vsyncpa [#allocation7], 1
    %s843 = scalar_lea.sflag [#allocation7], 1
    %844 = vsyncpa %s843, 1
    %845 = vsyncpa [#allocation5], 1
    %s846 = scalar_lea.sflag [#allocation5], 1
    %847 = vsyncpa %s846, 1

// kernel: tpu_custom_call.1
$region0: #{tpu_custom_call.1}
  #allocation0 [shape = 'u32[]', space=smem, size = 0x4, offset = 0x4, fixed_abs, tag = 'smem constant byte address 0x4 - core index']
  #allocation1 [shape = 'u32[144,128]{1,0:T(1,128)}', space=vmem, size = 0x12000, scoped, tag = 'internal scratch']
  #allocation2 [shape = 'f32[8,128]{1,0:T(8,128)}', space=vmem, size = 0x1000, scoped, tag = 'scratch operand']
  %s0 = inlined_call_operand.hbm [shape: f32[8,1024], index: 0, kind: input, shape index: {}]
  %s1 = inlined_call_operand.hbm [shape: bf16[1024,128], index: 1, kind: input, shape index: {}]
  %s2 = inlined_call_operand.vmem [shape: f32[1,128], index: 2, kind: input, shape index: {}]
  %s3 = inlined_call_operand.hbm [shape: bf16[128,128], index: 3, kind: input, shape index: {}]
  %s4 = inlined_call_operand.vmem [shape: f32[1,128], index: 4, kind: input, shape index: {}]
  %s5 = inlined_call_operand.hbm [shape: f32[8,128], index: 5, kind: output, shape index: {}]
  %s6 = sld [smem:[#allocation0]]
  $region73: #{tpu_custom_call.1} parent=0
    _
  %s8 = ssub.s32 1, %s6
  %s9 = scalar_select 0, %s8, %s6
  $region1: #{tpu_custom_call.1} parent=0
    #allocation3 [shape = 'u8[32768]{0}', space=vmem, size = 0x8000, scoped, tag = 'input window, operand 0']
    #allocation4 [shape = 's32[2]{0}', space=sflag, size = 0x8, scoped, tag = 'scoped memory for tpu_custom_call.1']
    #allocation5 [shape = 's32[2]{0}', space=sflag, size = 0x8, scoped, tag = 'scoped memory for tpu_custom_call.1']
    #allocation6 [shape = 'u8[262144]{0}', space=vmem, size = 0x40000, scoped, tag = 'input window, operand 1']
    #allocation7 [shape = 's32[2]{0}', space=sflag, size = 0x8, scoped, tag = 'scoped memory for tpu_custom_call.1']
    #allocation8 [shape = 'u8[32768]{0}', space=vmem, size = 0x8000, scoped, tag = 'input window, operand 3, single buffered']
    #allocation9 [shape = 'u8[4096]{0}', space=vmem, size = 0x1000, scoped, tag = 'output window, operand 0, single buffered']
    %10 = vsyncpa [#allocation4], 0
    %s11 = scalar_lea.sflag [#allocation4], 1
    %12 = vsyncpa %s11, 0
    %13 = vsyncpa [#allocation7], 0
    %s14 = scalar_lea.sflag [#allocation7], 1
    %15 = vsyncpa %s14, 0
    %16 = vsyncpa [#allocation5], 0
    loop: start=0, step=1, limit=4
    $region2: #{tpu_custom_call.1} parent=1 // loop_pre_header
      _
    $region3: #{tpu_custom_call.1} parent=1 // loop_header
      %s18 = sphi 0, %s22
      %p19 = scmp.ge.s32.totalorder %s18, 4
      %s25 = sphi 0, %s44
      %s26 = sphi 0, %s40
      %s27 = sphi 0, %s36
      %s28 = sphi 0, %s25
      %s29 = sphi 0, %s26
      %s30 = sphi 0, %s27
      %s31 = sphi 0, %s28
      %s32 = sphi 0, %s29
      %s33 = sphi 0, %s30
      %s49 = sphi 0, %s51
      %s52 = sphi 0, %s49
      %s53 = sphi 0, %s52
      %s69 = sphi 0, %s53
      %s75 = sphi 0, %s77
      %s78 = sphi 0, %s75
      %s79 = sphi 0, %s78
      %s95 = sphi 0, %s79
      %s99 = sphi 0, %s99
      %s101 = sphi 0, %s99
      %s102 = sphi 0, %s101
      %s116 = sphi 0, %s102
      %s122 = sphi 0, %s124
      %s125 = sphi 0, %s122
      %s126 = sphi 0, %s125
      %s142 = sphi 0, %s126
      %s148 = sphi 0, %s150
      %s151 = sphi 0, %s148
      %s152 = sphi 0, %s151
      %s168 = sphi 0, %s152
      %s176 = sphi 0, %s178
      %s179 = sphi 0, %s176
      %s180 = sphi 0, %s179
      %s196 = sphi 0, %s180
    $region4: #{tpu_custom_call.1} parent=1 // loop_header_branch
      %21 = sbr.rel (%p19) target = $region8
    $region5: #{tpu_custom_call.1} parent=1 // loop_body
      %s23 = ssub.s32 %s18, 1
      %s24 = ssub.s32 %s18, 2
      %s34 = sadd.s32 1, %s27
      %p35 = scmp.ge.s32.totalorder %s34, 2
      %s36 = scalar_select %p35, 0, %s34
      %s37 = sadd.s32 1, %s26
      %s38 = scalar_select %p35, %s37, %s26
      %p39 = scmp.ge.s32.totalorder %s38, 1
      %s40 = scalar_select %p39, 0, %s38
      %s41 = sadd.s32 1, %s25
      %s42 = scalar_select %p39, %s41, %s25
      %p43 = scmp.ge.s32.totalorder %s42, 1
      %s44 = scalar_select %p43, 0, %s42
      %s45 = ssub.s32 %s25, %s44
      %s46 = ssub.s32 %s27, %s36
      %s47 = sor.u32 %s45, %s46
      %p48 = scmp.eq.s32.totalorder %s47, 0
      %s50 = sadd.s32 %s49, 1
      %s51 = scalar_select %p48, %s49, %s50
      %p54 = pneg %p48
      %p55 = scmp.eq.s32.totalorder %s18, 1
      %p56 = por %p54, %p55
      %p57 = scmp.ne.s32.totalorder %s49, %s52
      %p58 = scmp.eq.s32.totalorder %s18, 0
      %p59 = por %p57, %p58
      %p60 = scmp.ne.s32.totalorder %s49, %s52
      %p61 = scmp.eq.s32.totalorder %s23, 1
      %p62 = por %p60, %p61
      %p63 = scmp.ne.s32.totalorder %s52, %s53
      %p64 = scmp.eq.s32.totalorder %s23, 0
      %p65 = por %p63, %p64
      %p66 = scmp.ne.s32.totalorder %s52, %s53
      %p67 = scmp.eq.s32.totalorder %s24, 1
      %p68 = por %p66, %p67
      %p70 = scmp.ne.s32.totalorder %s53, %s69
      %p71 = scmp.eq.s32.totalorder %s24, 0
      %p72 = por %p70, %p71
      %s73 = ssub.s32 %s27, %s36
      %p74 = scmp.eq.s32.totalorder %s73, 0
      %s76 = sadd.s32 %s75, 1
      %s77 = scalar_select %p74, %s75, %s76
      %p80 = pneg %p74
      %p81 = scmp.eq.s32.totalorder %s18, 1
      %p82 = por %p80, %p81
      %p83 = scmp.ne.s32.totalorder %s75, %s78
      %p84 = scmp.eq.s32.totalorder %s18, 0
      %p85 = por %p83, %p84
      %p86 = scmp.ne.s32.totalorder %s75, %s78
      %p87 = scmp.eq.s32.totalorder %s23, 1
      %p88 = por %p86, %p87
      %p89 = scmp.ne.s32.totalorder %s78, %s79
      %p90 = scmp.eq.s32.totalorder %s23, 0
      %p91 = por %p89, %p90
      %p92 = scmp.ne.s32.totalorder %s78, %s79
      %p93 = scmp.eq.s32.totalorder %s24, 1
      %p94 = por %p92, %p93
      %p96 = scmp.ne.s32.totalorder %s79, %s95
      %p97 = scmp.eq.s32.totalorder %s24, 0
      %p98 = por %p96, %p97
      %s100 = sadd.s32 %s99, 1
      %p103 = scmp.eq.s32.totalorder %s18, 1
      %p104 = scmp.ne.s32.totalorder %s99, %s101
      %p105 = scmp.eq.s32.totalorder %s18, 0
      %p106 = por %p104, %p105
      %p107 = scmp.ne.s32.totalorder %s99, %s101
      %p108 = scmp.eq.s32.totalorder %s23, 1
      %p109 = por %p107, %p108
      %p110 = scmp.ne.s32.totalorder %s101, %s102
      %p111 = scmp.eq.s32.totalorder %s23, 0
      %p112 = por %p110, %p111
      %p113 = scmp.ne.s32.totalorder %s101, %s102
      %p114 = scmp.eq.s32.totalorder %s24, 1
      %p115 = por %p113, %p114
      %p117 = scmp.ne.s32.totalorder %s102, %s116
      %p118 = scmp.eq.s32.totalorder %s24, 0
      %p119 = por %p117, %p118
      %s120 = ssub.s32 %s26, %s40
      %p121 = scmp.eq.s32.totalorder %s120, 0
      %s123 = sadd.s32 %s122, 1
      %s124 = scalar_select %p121, %s122, %s123
      %p127 = pneg %p121
      %p128 = scmp.eq.s32.totalorder %s18, 1
      %p129 = por %p127, %p128
      %p130 = scmp.ne.s32.totalorder %s122, %s125
      %p131 = scmp.eq.s32.totalorder %s18, 0
      %p132 = por %p130, %p131
      %p133 = scmp.ne.s32.totalorder %s122, %s125
      %p134 = scmp.eq.s32.totalorder %s23, 1
      %p135 = por %p133, %p134
      %p136 = scmp.ne.s32.totalorder %s125, %s126
      %p137 = scmp.eq.s32.totalorder %s23, 0
      %p138 = por %p136, %p137
      %p139 = scmp.ne.s32.totalorder %s125, %s126
      %p140 = scmp.eq.s32.totalorder %s24, 1
      %p141 = por %p139, %p140
      %p143 = scmp.ne.s32.totalorder %s126, %s142
      %p144 = scmp.eq.s32.totalorder %s24, 0
      %p145 = por %p143, %p144
      %s146 = ssub.s32 %s26, %s40
      %p147 = scmp.eq.s32.totalorder %s146, 0
      %s149 = sadd.s32 %s148, 1
      %s150 = scalar_select %p147, %s148, %s149
      %p153 = pneg %p147
      %p154 = scmp.eq.s32.totalorder %s18, 1
      %p155 = por %p153, %p154
      %p156 = scmp.ne.s32.totalorder %s148, %s151
      %p157 = scmp.eq.s32.totalorder %s18, 0
      %p158 = por %p156, %p157
      %p159 = scmp.ne.s32.totalorder %s148, %s151
      %p160 = scmp.eq.s32.totalorder %s23, 1
      %p161 = por %p159, %p160
      %p162 = scmp.ne.s32.totalorder %s151, %s152
      %p163 = scmp.eq.s32.totalorder %s23, 0
      %p164 = por %p162, %p163
      %p165 = scmp.ne.s32.totalorder %s151, %s152
      %p166 = scmp.eq.s32.totalorder %s24, 1
      %p167 = por %p165, %p166
      %p169 = scmp.ne.s32.totalorder %s152, %s168
      %p170 = scmp.eq.s32.totalorder %s24, 0
      %p171 = por %p169, %p170
      %s172 = ssub.s32 %s25, %s44
      %s173 = ssub.s32 %s26, %s40
      %s174 = sor.u32 %s172, %s173
      %p175 = scmp.eq.s32.totalorder %s174, 0
      %s177 = sadd.s32 %s176, 1
      %s178 = scalar_select %p175, %s176, %s177
      %p181 = pneg %p175
      %p182 = scmp.eq.s32.totalorder %s18, 1
      %p183 = por %p181, %p182
      %p184 = scmp.ne.s32.totalorder %s176, %s179
      %p185 = scmp.eq.s32.totalorder %s18, 0
      %p186 = por %p184, %p185
      %p187 = scmp.ne.s32.totalorder %s176, %s179
      %p188 = scmp.eq.s32.totalorder %s23, 1
      %p189 = por %p187, %p188
      %p190 = scmp.ne.s32.totalorder %s179, %s180
      %p191 = scmp.eq.s32.totalorder %s23, 0
      %p192 = por %p190, %p191
      %p193 = scmp.ne.s32.totalorder %s179, %s180
      %p194 = scmp.eq.s32.totalorder %s24, 1
      %p195 = por %p193, %p194
      %p197 = scmp.ne.s32.totalorder %s180, %s196
      %p198 = scmp.eq.s32.totalorder %s24, 0
      %p199 = por %p197, %p198
      %p200 = scmp.le.s32.totalorder 1, %s18
      %p201 = scmp.lt.s32.totalorder %s18, 3
      %p202 = pnand %p200, %p201
      %p203 = pneg %p202
      // Predicated region
      $region9: #{tpu_custom_call.1} parent=5 // pred_check
        _
      $region10: #{tpu_custom_call.1} parent=5 // pred_check_branch
        %205 = sbr.rel (%p202) target = $region12
      $region11: #{tpu_custom_call.1} parent=5 // pred_region
        %s206 = ssub.s32 %s18, 1
        // Predicated region
        $region13: #{tpu_custom_call.1} parent=11 // pred_check
          %p207 = pneg %p112
        $region14: #{tpu_custom_call.1} parent=11 // pred_check_branch
          %209 = sbr.rel (%p207) target = $region16
        $region15: #{tpu_custom_call.1} parent=11 // pred_region
          _
        $region16: #{tpu_custom_call.1} parent=11 // pred_fallthru
          _
        // Predicated region
        $region17: #{tpu_custom_call.1} parent=11 // pred_check
          %p210 = pneg %p138
        $region18: #{tpu_custom_call.1} parent=11 // pred_check_branch
          %212 = sbr.rel (%p210) target = $region20
        $region19: #{tpu_custom_call.1} parent=11 // pred_region
          %s214 = ssub.s32 1024, 1024
          %215 = vsyncadd [#allocation7], %s214
          %s216 = smul.addr %s29, 64
          %s217 = scalar_lea.hbm %s3, %s216
          %s218 = sshll.u32 [#allocation8], 4
          %s219 = int_to_ptr.vmem [resolvable:$true] %s218
          %224 = dma.hbm_to_vmem [thread:$0]  %s217, 1024, %s219, [#allocation7], 64, 64, 4
        $region20: #{tpu_custom_call.1} parent=11 // pred_fallthru
          _
        // Predicated region
        $region21: #{tpu_custom_call.1} parent=11 // pred_check
          %p225 = pneg %p164
        $region22: #{tpu_custom_call.1} parent=11 // pred_check_branch
          %227 = sbr.rel (%p225) target = $region24
        $region23: #{tpu_custom_call.1} parent=11 // pred_region
          %p228 = scmp.lt.s32.totalorder %s29, 0
          %s229 = scalar_select %p228, %s29, 0
          %s230 = scalar_lea.vmem %s4, %s229
        $region24: #{tpu_custom_call.1} parent=11 // pred_fallthru
          _
      $region12: #{tpu_custom_call.1} parent=5 // pred_fallthru
        _
      %p231 = scmp.lt.s32.totalorder %s18, 2
      // Predicated region
      $region25: #{tpu_custom_call.1} parent=5 // pred_check
        %p232 = pneg %p231
      $region26: #{tpu_custom_call.1} parent=5 // pred_check_branch
        %234 = sbr.rel (%p232) target = $region28
      $region27: #{tpu_custom_call.1} parent=5 // pred_region
        // Predicated region
        $region29: #{tpu_custom_call.1} parent=27 // pred_check
          %p235 = pneg %p59
        $region30: #{tpu_custom_call.1} parent=27 // pred_check_branch
          %237 = sbr.rel (%p235) target = $region32
        $region31: #{tpu_custom_call.1} parent=27 // pred_region
          %s238 = sand.u32 %s49, 1
          %s239 = scalar_lea.sflag [#allocation4], %s238
          %s240 = sand.u32 %s49, 1
          %s241 = smul.addr %s240, 32
          %s242 = scalar_lea.vmem [#allocation3], %s241
          %s243 = smul.u32 4, %s27
          %s245 = ssub.s32 512, 512
          %246 = vsyncadd %s239, %s245
          %s247 = smul.addr %s25, 8
          %s248 = sadd.s32 %s243, %s247
          %s249 = smul.addr %s248, 128
          %s250 = scalar_lea.hbm %s0, %s249
          %s252 = sshll.u32 %s242, 4
          %s253 = int_to_ptr.vmem [resolvable:$true] %s252
          %255 = dma.hbm_to_vmem [thread:$0]  %s250, 512, %s253, %s239
        $region32: #{tpu_custom_call.1} parent=27 // pred_fallthru
          _
        // Predicated region
        $region33: #{tpu_custom_call.1} parent=27 // pred_check
          %p256 = pneg %p85
        $region34: #{tpu_custom_call.1} parent=27 // pred_check_branch
          %258 = sbr.rel (%p256) target = $region36
        $region35: #{tpu_custom_call.1} parent=27 // pred_region
          %s259 = sand.u32 %s18, 1
          %s260 = scalar_lea.sflag [#allocation7], %s259
          %s261 = sand.u32 %s75, 1
          %s262 = smul.addr %s261, 256
          %s263 = scalar_lea.vmem [#allocation6], %s262
          %s264 = smul.u32 64, %s27
          %s266 = ssub.s32 4096, 4096
          %267 = vsyncadd %s260, %s266
          %s268 = smul.addr %s264, 64
          %s269 = scalar_lea.hbm %s1, %s268
          %s270 = sshll.u32 %s263, 4
          %s271 = int_to_ptr.vmem [resolvable:$true] %s270
          %276 = dma.hbm_to_vmem [thread:$0]  %s269, 4096, %s271, %s260, 64, 64, 4
        $region36: #{tpu_custom_call.1} parent=27 // pred_fallthru
          _
      $region28: #{tpu_custom_call.1} parent=5 // pred_fallthru
        _
      %p277 = scmp.le.s32.totalorder 1, %s18
      %p278 = scmp.lt.s32.totalorder %s18, 3
      %p279 = pnand %p277, %p278
      %p280 = pneg %p279
      // Predicated region
      $region37: #{tpu_custom_call.1} parent=5 // pred_check
        _
      $region38: #{tpu_custom_call.1} parent=5 // pred_check_branch
        %282 = sbr.rel (%p279) target = $region40
      $region39: #{tpu_custom_call.1} parent=5 // pred_region
        %s283 = ssub.s32 %s18, 1
        %s284 = sand.u32 %s52, 1
        %s285 = scalar_lea.sflag [#allocation4], %s284
        %s286 = sand.u32 %s52, 1
        %s287 = smul.addr %s286, 32
        %s288 = scalar_lea.vmem [#allocation3], %s287
        // Predicated region
        $region41: #{tpu_custom_call.1} parent=39 // pred_check
          %p289 = pneg %p65
        $region42: #{tpu_custom_call.1} parent=39 // pred_check_branch
          %291 = sbr.rel (%p289) target = $region44
        $region43: #{tpu_custom_call.1} parent=39 // pred_region
          %292 = dma.done %s285, 512
        $region44: #{tpu_custom_call.1} parent=39 // pred_fallthru
          _
        %s293 = sand.u32 %s23, 1
        %s294 = scalar_lea.sflag [#allocation7], %s293
        %s295 = sand.u32 %s78, 1
        %s296 = smul.addr %s295, 256
        %s297 = scalar_lea.vmem [#allocation6], %s296
        // Predicated region
        $region45: #{tpu_custom_call.1} parent=39 // pred_check
          %p298 = pneg %p91
        $region46: #{tpu_custom_call.1} parent=39 // pred_check_branch
          %300 = sbr.rel (%p298) target = $region48
        $region47: #{tpu_custom_call.1} parent=39 // pred_region
          %301 = dma.done %s294, 4096
        $region48: #{tpu_custom_call.1} parent=39 // pred_fallthru
          _
        // Predicated region
        $region49: #{tpu_custom_call.1} parent=39 // pred_check
          %p302 = pneg %p138
        $region50: #{tpu_custom_call.1} parent=39 // pred_check_branch
          %304 = sbr.rel (%p302) target = $region52
        $region51: #{tpu_custom_call.1} parent=39 // pred_region
          %305 = dma.done [#allocation7], 1024
        $region52: #{tpu_custom_call.1} parent=39 // pred_fallthru
          _
        %s306 = sand.u32 %s52, 1
        %s307 = scalar_lea.sflag [#allocation4], %s306
        %s308 = sand.u32 %s52, 1
        %s309 = smul.addr %s308, 32
        %s310 = scalar_lea.vmem [#allocation3], %s309
        %p311 = pneg %p65
        %p312 = pneg %p62
        %s313 = sand.u32 %s23, 1
        %s314 = scalar_lea.sflag [#allocation7], %s313
        %s315 = sand.u32 %s78, 1
        %s316 = smul.addr %s315, 256
        %s317 = scalar_lea.vmem [#allocation6], %s316
        %p318 = pneg %p91
        %p319 = pneg %p88
        %p320 = pneg %p112
        %p321 = pneg %p109
        %p322 = pneg %p138
        %p323 = pneg %p135
        %p324 = scmp.lt.s32.totalorder %s29, 0
        %s325 = scalar_select %p324, %s29, 0
        %s326 = scalar_lea.vmem %s4, %s325
        %p327 = pneg %p164
        %p328 = pneg %p161
        %p329 = pneg %p192
        %p330 = pneg %p189
        %s331 = smul.u32 4, %s30
        %s332 = smul.u32 64, %s30
        %p333 = scmp.lt.s32.totalorder %s29, 0
        %s334 = scalar_select %p333, %s29, 0
        %s335 = scalar_lea.vmem %s4, %s334
        %p337 = scmp.eq.s32.totalorder %s30, 0
        // Predicated region
        $region53: #{tpu_custom_call.1} parent=39 // pred_check
          %p338 = pneg %p337
        $region54: #{tpu_custom_call.1} parent=39 // pred_check_branch
          %340 = sbr.rel (%p338) target = $region56
        $region55: #{tpu_custom_call.1} parent=39 // pred_region
          %341 = vst [vmem:[#allocation2] sm:$0xff] 0.0
        $region56: #{tpu_custom_call.1} parent=39 // pred_fallthru
          _
        %v342 = vld [vmem:[#allocation2] sm:$0xff]
        %v343 = vld [vmem:[%s288] sm:$0xff]
        %v344 = vld [vmem:[%s288 + $0x8] sm:$0xff]
        %v345 = vld [vmem:[%s288 + $0x10] sm:$0xff]
        %v346 = vld [vmem:[%s288 + $0x18] sm:$0xff]
        %v347 = vpack.c.bf16 %v343, %v343
        %v348 = vpack.c.bf16 %v344, %v344
        %v349 = vpack.c.bf16 %v345, %v345
        %v350 = vpack.c.bf16 %v346, %v346
        %v351 = vld [vmem:[%s297] sm:$0xf]
        %v352 = vld [vmem:[%s297 + $0x4] sm:$0xf]
        %v353 = vld [vmem:[%s297 + $0x8] sm:$0xf]
        %v354 = vld [vmem:[%s297 + $0xc] sm:$0xf]
        %v355 = vld [vmem:[%s297 + $0x10] sm:$0xf]
        %v356 = vld [vmem:[%s297 + $0x14] sm:$0xf]
        %v357 = vld [vmem:[%s297 + $0x18] sm:$0xf]
        %v358 = vld [vmem:[%s297 + $0x1c] sm:$0xf]
        %v359 = vld [vmem:[%s297 + $0x20] sm:$0xf]
        %v360 = vld [vmem:[%s297 + $0x24] sm:$0xf]
        %v361 = vld [vmem:[%s297 + $0x28] sm:$0xf]
        %v362 = vld [vmem:[%s297 + $0x2c] sm:$0xf]
        %v363 = vld [vmem:[%s297 + $0x30] sm:$0xf]
        %v364 = vld [vmem:[%s297 + $0x34] sm:$0xf]
        %v365 = vld [vmem:[%s297 + $0x38] sm:$0xf]
        %v366 = vld [vmem:[%s297 + $0x3c] sm:$0xf]
        %v367 = vld [vmem:[%s297 + $0x40] sm:$0xf]
        %v368 = vld [vmem:[%s297 + $0x44] sm:$0xf]
        %v369 = vld [vmem:[%s297 + $0x48] sm:$0xf]
        %v370 = vld [vmem:[%s297 + $0x4c] sm:$0xf]
        %v371 = vld [vmem:[%s297 + $0x50] sm:$0xf]
        %v372 = vld [vmem:[%s297 + $0x54] sm:$0xf]
        %v373 = vld [vmem:[%s297 + $0x58] sm:$0xf]
        %v374 = vld [vmem:[%s297 + $0x5c] sm:$0xf]
        %v375 = vld [vmem:[%s297 + $0x60] sm:$0xf]
        %v376 = vld [vmem:[%s297 + $0x64] sm:$0xf]
        %v377 = vld [vmem:[%s297 + $0x68] sm:$0xf]
        %v378 = vld [vmem:[%s297 + $0x6c] sm:$0xf]
        %v379 = vld [vmem:[%s297 + $0x70] sm:$0xf]
        %v380 = vld [vmem:[%s297 + $0x74] sm:$0xf]
        %v381 = vld [vmem:[%s297 + $0x78] sm:$0xf]
        %v382 = vld [vmem:[%s297 + $0x7c] sm:$0xf]
        %v383 = vld [vmem:[%s297 + $0x80] sm:$0xf]
        %v384 = vld [vmem:[%s297 + $0x84] sm:$0xf]
        %v385 = vld [vmem:[%s297 + $0x88] sm:$0xf]
        %v386 = vld [vmem:[%s297 + $0x8c] sm:$0xf]
        %v387 = vld [vmem:[%s297 + $0x90] sm:$0xf]
        %v388 = vld [vmem:[%s297 + $0x94] sm:$0xf]
        %v389 = vld [vmem:[%s297 + $0x98] sm:$0xf]
        %v390 = vld [vmem:[%s297 + $0x9c] sm:$0xf]
        %v391 = vld [vmem:[%s297 + $0xa0] sm:$0xf]
        %v392 = vld [vmem:[%s297 + $0xa4] sm:$0xf]
        %v393 = vld [vmem:[%s297 + $0xa8] sm:$0xf]
        %v394 = vld [vmem:[%s297 + $0xac] sm:$0xf]
        %v395 = vld [vmem:[%s297 + $0xb0] sm:$0xf]
        %v396 = vld [vmem:[%s297 + $0xb4] sm:$0xf]
        %v397 = vld [vmem:[%s297 + $0xb8] sm:$0xf]
        %v398 = vld [vmem:[%s297 + $0xbc] sm:$0xf]
        %v399 = vld [vmem:[%s297 + $0xc0] sm:$0xf]
        %v400 = vld [vmem:[%s297 + $0xc4] sm:$0xf]
        %v401 = vld [vmem:[%s297 + $0xc8] sm:$0xf]
        %v402 = vld [vmem:[%s297 + $0xcc] sm:$0xf]
        %v403 = vld [vmem:[%s297 + $0xd0] sm:$0xf]
        %v404 = vld [vmem:[%s297 + $0xd4] sm:$0xf]
        %v405 = vld [vmem:[%s297 + $0xd8] sm:$0xf]
        %v406 = vld [vmem:[%s297 + $0xdc] sm:$0xf]
        %v407 = vld [vmem:[%s297 + $0xe0] sm:$0xf]
        %v408 = vld [vmem:[%s297 + $0xe4] sm:$0xf]
        %v409 = vld [vmem:[%s297 + $0xe8] sm:$0xf]
        %v410 = vld [vmem:[%s297 + $0xec] sm:$0xf]
        %v411 = vld [vmem:[%s297 + $0xf0] sm:$0xf]
        %v412 = vld [vmem:[%s297 + $0xf4] sm:$0xf]
        %v413 = vld [vmem:[%s297 + $0xf8] sm:$0xf]
        %v414 = vld [vmem:[%s297 + $0xfc] sm:$0xf]
        %v479 = vunpack.c.l.b16 %v351
        %v480 = vunpack.c.l.b16 %v352
        %v481 = vunpack.c.l.b16 %v353
        %v482 = vunpack.c.l.b16 %v354
        %v483 = vunpack.c.l.b16 %v355
        %v484 = vunpack.c.l.b16 %v356
        %v485 = vunpack.c.l.b16 %v357
        %v486 = vunpack.c.l.b16 %v358
        %v487 = vunpack.c.l.b16 %v359
        %v488 = vunpack.c.l.b16 %v360
        %v489 = vunpack.c.l.b16 %v361
        %v490 = vunpack.c.l.b16 %v362
        %v491 = vunpack.c.l.b16 %v363
        %v492 = vunpack.c.l.b16 %v364
        %v493 = vunpack.c.l.b16 %v365
        %v494 = vunpack.c.l.b16 %v366
        %v495 = vunpack.c.l.b16 %v367
        %v496 = vunpack.c.l.b16 %v368
        %v497 = vunpack.c.l.b16 %v369
        %v498 = vunpack.c.l.b16 %v370
        %v499 = vunpack.c.l.b16 %v371
        %v500 = vunpack.c.l.b16 %v372
        %v501 = vunpack.c.l.b16 %v373
        %v502 = vunpack.c.l.b16 %v374
        %v503 = vunpack.c.l.b16 %v375
        %v504 = vunpack.c.l.b16 %v376
        %v505 = vunpack.c.l.b16 %v377
        %v506 = vunpack.c.l.b16 %v378
        %v507 = vunpack.c.l.b16 %v379
        %v508 = vunpack.c.l.b16 %v380
        %v509 = vunpack.c.l.b16 %v381
        %v510 = vunpack.c.l.b16 %v382
        %v511 = vunpack.c.l.b16 %v383
        %v512 = vunpack.c.l.b16 %v384
        %v513 = vunpack.c.l.b16 %v385
        %v514 = vunpack.c.l.b16 %v386
        %v515 = vunpack.c.l.b16 %v387
        %v516 = vunpack.c.l.b16 %v388
        %v517 = vunpack.c.l.b16 %v389
        %v518 = vunpack.c.l.b16 %v390
        %v519 = vunpack.c.l.b16 %v391
        %v520 = vunpack.c.l.b16 %v392
        %v521 = vunpack.c.l.b16 %v393
        %v522 = vunpack.c.l.b16 %v394
        %v523 = vunpack.c.l.b16 %v395
        %v524 = vunpack.c.l.b16 %v396
        %v525 = vunpack.c.l.b16 %v397
        %v526 = vunpack.c.l.b16 %v398
        %v527 = vunpack.c.l.b16 %v399
        %v528 = vunpack.c.l.b16 %v400
        %v529 = vunpack.c.l.b16 %v401
        %v530 = vunpack.c.l.b16 %v402
        %v531 = vunpack.c.l.b16 %v403
        %v532 = vunpack.c.l.b16 %v404
        %v533 = vunpack.c.l.b16 %v405
        %v534 = vunpack.c.l.b16 %v406
        %v535 = vunpack.c.l.b16 %v407
        %v536 = vunpack.c.l.b16 %v408
        %v537 = vunpack.c.l.b16 %v409
        %v538 = vunpack.c.l.b16 %v410
        %v539 = vunpack.c.l.b16 %v411
        %v540 = vunpack.c.l.b16 %v412
        %v541 = vunpack.c.l.b16 %v413
        %v542 = vunpack.c.l.b16 %v414
        %v543 = vpack.c.b16 %v480, %v479
        %v544 = vpack.c.b16 %v482, %v481
        %v545 = vpack.c.b16 %v484, %v483
        %v546 = vpack.c.b16 %v486, %v485
        %v547 = vpack.c.b16 %v488, %v487
        %v548 = vpack.c.b16 %v490, %v489
        %v549 = vpack.c.b16 %v492, %v491
        %v550 = vpack.c.b16 %v494, %v493
        %v551 = vpack.c.b16 %v496, %v495
        %v552 = vpack.c.b16 %v498, %v497
        %v553 = vpack.c.b16 %v500, %v499
        %v554 = vpack.c.b16 %v502, %v501
        %v555 = vpack.c.b16 %v504, %v503
        %v556 = vpack.c.b16 %v506, %v505
        %v557 = vpack.c.b16 %v508, %v507
        %v558 = vpack.c.b16 %v510, %v509
        %v559 = vpack.c.b16 %v512, %v511
        %v560 = vpack.c.b16 %v514, %v513
        %v561 = vpack.c.b16 %v516, %v515
        %v562 = vpack.c.b16 %v518, %v517
        %v563 = vpack.c.b16 %v520, %v519
        %v564 = vpack.c.b16 %v522, %v521
        %v565 = vpack.c.b16 %v524, %v523
        %v566 = vpack.c.b16 %v526, %v525
        %v567 = vpack.c.b16 %v528, %v527
        %v568 = vpack.c.b16 %v530, %v529
        %v569 = vpack.c.b16 %v532, %v531
        %v570 = vpack.c.b16 %v534, %v533
        %v571 = vpack.c.b16 %v536, %v535
        %v572 = vpack.c.b16 %v538, %v537
        %v573 = vpack.c.b16 %v540, %v539
        %v574 = vpack.c.b16 %v542, %v541
        %607 = vmatprep.subr.bf16.mxu0 0
        %608 = vmatpush1.bf16.msra.mxu0 %v543
        %609 = vmatprep.subr.bf16.mxu0 0
        %610 = vmatpush1.bf16.msra.mxu0 %v544
        %611 = vmatprep.subr.bf16.mxu0 0
        %612 = vmatpush1.bf16.msra.mxu0 %v545
        %613 = vmatprep.subr.bf16.mxu0 0
        %614 = vmatpush1.bf16.msra.mxu0 %v546
        %615 = vmatprep.subr.bf16.mxu0 0
        %616 = vmatpush1.bf16.msra.mxu0 %v547
        %617 = vmatprep.subr.bf16.mxu0 0
        %618 = vmatpush1.bf16.msra.mxu0 %v548
        %619 = vmatprep.subr.bf16.mxu0 0
        %620 = vmatpush1.bf16.msra.mxu0 %v549
        %621 = vmatprep.subr.bf16.mxu0 0
        %622 = vmatpush1.bf16.msra.mxu0 %v550
        %623 = vmatprep.subr.bf16.mxu0 0
        %624 = vmatpush1.bf16.msra.mxu0 %v551
        %625 = vmatprep.subr.bf16.mxu0 0
        %626 = vmatpush1.bf16.msra.mxu0 %v552
        %627 = vmatprep.subr.bf16.mxu0 0
        %628 = vmatpush1.bf16.msra.mxu0 %v553
        %629 = vmatprep.subr.bf16.mxu0 0
        %630 = vmatpush1.bf16.msra.mxu0 %v554
        %631 = vmatprep.subr.bf16.mxu0 0
        %632 = vmatpush1.bf16.msra.mxu0 %v555
        %633 = vmatprep.subr.bf16.mxu0 0
        %634 = vmatpush1.bf16.msra.mxu0 %v556
        %635 = vmatprep.subr.bf16.mxu0 0
        %636 = vmatpush1.bf16.msra.mxu0 %v557
        %637 = vmatprep.subr.bf16.mxu0 0
        %638 = vmatpush1.bf16.msra.mxu0 %v558
        %639 = vmatprep.mubr.bf16.mxu0 %v348
        %640 = vmatmul.mubr.bf16.gmra.mrb[0].mxu0 %v347
        %v641 = vpop.f32.mrb[0].mxu0
        %v642 = vadd.f32 0.0, %v641
        %v643 = vpop.f32.mrb[0].mxu0
        %v644 = vpop.f32.mrb[0].mxu0
        %v645 = vpop.f32.mrb[0].mxu0
        %646 = vdwg.mxu0
        %647 = vmatprep.subr.bf16.mxu0 0
        %648 = vmatpush1.bf16.msra.mxu0 %v559
        %649 = vmatprep.subr.bf16.mxu0 0
        %650 = vmatpush1.bf16.msra.mxu0 %v560
        %651 = vmatprep.subr.bf16.mxu0 0
        %652 = vmatpush1.bf16.msra.mxu0 %v561
        %653 = vmatprep.subr.bf16.mxu0 0
        %654 = vmatpush1.bf16.msra.mxu0 %v562
        %655 = vmatprep.subr.bf16.mxu0 0
        %656 = vmatpush1.bf16.msra.mxu0 %v563
        %657 = vmatprep.subr.bf16.mxu0 0
        %658 = vmatpush1.bf16.msra.mxu0 %v564
        %659 = vmatprep.subr.bf16.mxu0 0
        %660 = vmatpush1.bf16.msra.mxu0 %v565
        %661 = vmatprep.subr.bf16.mxu0 0
        %662 = vmatpush1.bf16.msra.mxu0 %v566
        %663 = vmatprep.subr.bf16.mxu0 0
        %664 = vmatpush1.bf16.msra.mxu0 %v567
        %665 = vmatprep.subr.bf16.mxu0 0
        %666 = vmatpush1.bf16.msra.mxu0 %v568
        %667 = vmatprep.subr.bf16.mxu0 0
        %668 = vmatpush1.bf16.msra.mxu0 %v569
        %669 = vmatprep.subr.bf16.mxu0 0
        %670 = vmatpush1.bf16.msra.mxu0 %v570
        %671 = vmatprep.subr.bf16.mxu0 0
        %672 = vmatpush1.bf16.msra.mxu0 %v571
        %673 = vmatprep.subr.bf16.mxu0 0
        %674 = vmatpush1.bf16.msra.mxu0 %v572
        %675 = vmatprep.subr.bf16.mxu0 0
        %676 = vmatpush1.bf16.msra.mxu0 %v573
        %677 = vmatprep.subr.bf16.mxu0 0
        %678 = vmatpush1.bf16.msra.mxu0 %v574
        %679 = vmatprep.mubr.bf16.mxu0 %v350
        %680 = vmatmul.mubr.bf16.gmra.mrb[0].mxu0 %v349
        %v681 = vpop.f32.mrb[0].mxu0
        %v682 = vadd.f32 %v642, %v681
        %v683 = vpop.f32.mrb[0].mxu0
        %v684 = vpop.f32.mrb[0].mxu0
        %v685 = vpop.f32.mrb[0].mxu0
        %686 = vdwg.mxu0
        %v687 = vadd.f32 %v342, %v682
        %688 = vst [vmem:[#allocation2] sm:$0xff] %v687
        %p689 = scmp.eq.s32.totalorder %s30, 1
        // Predicated region
        $region57: #{tpu_custom_call.1} parent=39 // pred_check
          %p690 = pneg %p689
        $region58: #{tpu_custom_call.1} parent=39 // pred_check_branch
          %692 = sbr.rel (%p690) target = $region60
        $region59: #{tpu_custom_call.1} parent=39 // pred_region
          %v693 = vld [vmem:[#allocation2] sm:$0xff]
          %v694 = vld [vmem:[%s2] sm:$0x1]
          %v696 = vlaneseq
          %v697 = vshrl.u32 %v696, 7
          %v698 = vsub.s32 0, %v697
          %v699 = vrot.slane %v694, %v698
          %v701 = vadd.f32 %v693, %v699
          %v702 = vmax.f32 %v701, 0.0
          %v703 = vpack.c.bf16 %v702, %v702
          %v704 = vld [vmem:[#allocation8] sm:$0xf]
          %v705 = vld [vmem:[#allocation8 + $0x4] sm:$0xf]
          %v706 = vld [vmem:[#allocation8 + $0x8] sm:$0xf]
          %v707 = vld [vmem:[#allocation8 + $0xc] sm:$0xf]
          %v708 = vld [vmem:[#allocation8 + $0x10] sm:$0xf]
          %v709 = vld [vmem:[#allocation8 + $0x14] sm:$0xf]
          %v710 = vld [vmem:[#allocation8 + $0x18] sm:$0xf]
          %v711 = vld [vmem:[#allocation8 + $0x1c] sm:$0xf]
          %v712 = vld [vmem:[#allocation8 + $0x20] sm:$0xf]
          %v713 = vld [vmem:[#allocation8 + $0x24] sm:$0xf]
          %v714 = vld [vmem:[#allocation8 + $0x28] sm:$0xf]
          %v715 = vld [vmem:[#allocation8 + $0x2c] sm:$0xf]
          %v716 = vld [vmem:[#allocation8 + $0x30] sm:$0xf]
          %v717 = vld [vmem:[#allocation8 + $0x34] sm:$0xf]
          %v718 = vld [vmem:[#allocation8 + $0x38] sm:$0xf]
          %v719 = vld [vmem:[#allocation8 + $0x3c] sm:$0xf]
          %v720 = vld [vmem:[%s335] sm:$0x1]
          %v722 = vlaneseq
          %v723 = vshrl.u32 %v722, 7
          %v724 = vsub.s32 0, %v723
          %v725 = vrot.slane %v720, %v724
          %v743 = vunpack.c.l.b16 %v704
          %v744 = vunpack.c.l.b16 %v705
          %v745 = vunpack.c.l.b16 %v706
          %v746 = vunpack.c.l.b16 %v707
          %v747 = vunpack.c.l.b16 %v708
          %v748 = vunpack.c.l.b16 %v709
          %v749 = vunpack.c.l.b16 %v710
          %v750 = vunpack.c.l.b16 %v711
          %v751 = vunpack.c.l.b16 %v712
          %v752 = vunpack.c.l.b16 %v713
          %v753 = vunpack.c.l.b16 %v714
          %v754 = vunpack.c.l.b16 %v715
          %v755 = vunpack.c.l.b16 %v716
          %v756 = vunpack.c.l.b16 %v717
          %v757 = vunpack.c.l.b16 %v718
          %v758 = vunpack.c.l.b16 %v719
          %v759 = vpack.c.b16 %v744, %v743
          %v760 = vpack.c.b16 %v746, %v745
          %v761 = vpack.c.b16 %v748, %v747
          %v762 = vpack.c.b16 %v750, %v749
          %v763 = vpack.c.b16 %v752, %v751
          %v764 = vpack.c.b16 %v754, %v753
          %v765 = vpack.c.b16 %v756, %v755
          %v766 = vpack.c.b16 %v758, %v757
          %775 = vmatprep.subr.bf16.mxu0 0
          %776 = vmatpush1.bf16.msra.mxu0 %v759
          %777 = vmatprep.subr.bf16.mxu0 0
          %778 = vmatpush1.bf16.msra.mxu0 %v760
          %779 = vmatprep.subr.bf16.mxu0 0
          %780 = vmatpush1.bf16.msra.mxu0 %v761
          %781 = vmatprep.subr.bf16.mxu0 0
          %782 = vmatpush1.bf16.msra.mxu0 %v762
          %783 = vmatprep.subr.bf16.mxu0 0
          %784 = vmatpush1.bf16.msra.mxu0 %v763
          %785 = vmatprep.subr.bf16.mxu0 0
          %786 = vmatpush1.bf16.msra.mxu0 %v764
          %787 = vmatprep.subr.bf16.mxu0 0
          %788 = vmatpush1.bf16.msra.mxu0 %v765
          %789 = vmatprep.subr.bf16.mxu0 0
          %790 = vmatpush1.bf16.msra.mxu0 %v766
          %791 = vmatprep.subr.bf16.mxu0 0
          %792 = vmatpush1.bf16.msra.mxu0 0
          %793 = vmatprep.subr.bf16.mxu0 0
          %794 = vmatpush1.bf16.msra.mxu0 0
          %795 = vmatprep.subr.bf16.mxu0 0
          %796 = vmatpush1.bf16.msra.mxu0 0
          %797 = vmatprep.subr.bf16.mxu0 0
          %798 = vmatpush1.bf16.msra.mxu0 0
          %799 = vmatprep.subr.bf16.mxu0 0
          %800 = vmatpush1.bf16.msra.mxu0 0
          %801 = vmatprep.subr.bf16.mxu0 0
          %802 = vmatpush1.bf16.msra.mxu0 0
          %803 = vmatprep.subr.bf16.mxu0 0
          %804 = vmatpush1.bf16.msra.mxu0 0
          %805 = vmatprep.subr.bf16.mxu0 0
          %806 = vmatpush1.bf16.msra.mxu0 0
          %807 = vmatprep.mubr.bf16.mxu0 0
          %808 = vmatmul.mubr.bf16.gmra.mrb[0].mxu0 %v703
          %v809 = vpop.f32.mrb[0].mxu0
          %v810 = vadd.f32 %v725, %v809
          %v811 = vpop.f32.mrb[0].mxu0
          %v812 = vpop.f32.mrb[0].mxu0
          %v813 = vpop.f32.mrb[0].mxu0
          %814 = vdwg.mxu0
          %815 = vst [vmem:[#allocation9] sm:$0xff] %v810
        $region60: #{tpu_custom_call.1} parent=39 // pred_fallthru
          _
        // Predicated region
        $region61: #{tpu_custom_call.1} parent=39 // pred_check
          %p816 = pneg %p189
        $region62: #{tpu_custom_call.1} parent=39 // pred_check_branch
          %818 = sbr.rel (%p816) target = $region64
        $region63: #{tpu_custom_call.1} parent=39 // pred_region
          %s820 = ssub.s32 128, 128
          %821 = vsyncadd [#allocation5], %s820
          %s822 = sadd.s32 %s29, %s28
          %s823 = smul.addr %s822, 128
          %s824 = scalar_lea.hbm %s5, %s823
          %s826 = sshll.u32 [#allocation9], 4
          %s827 = int_to_ptr.vmem [resolvable:$true] %s826
          %829 = dma.vmem_to_hbm [thread:$0]  %s827, 128, %s824, [#allocation5]
        $region64: #{tpu_custom_call.1} parent=39 // pred_fallthru
          _
        // Predicated region
        $region65: #{tpu_custom_call.1} parent=39 // pred_check
          %p830 = pneg %p189
        $region66: #{tpu_custom_call.1} parent=39 // pred_check_branch
          %832 = sbr.rel (%p830) target = $region68
        $region67: #{tpu_custom_call.1} parent=39 // pred_region
          %833 = dma.done [#allocation5], 128
        $region68: #{tpu_custom_call.1} parent=39 // pred_fallthru
          _
      $region40: #{tpu_custom_call.1} parent=5 // pred_fallthru
        _
      %p834 = scmp.le.s32.totalorder 2, %s18
      // Predicated region
      $region69: #{tpu_custom_call.1} parent=5 // pred_check
        %p835 = pneg %p834
      $region70: #{tpu_custom_call.1} parent=5 // pred_check_branch
        %837 = sbr.rel (%p835) target = $region72
      $region71: #{tpu_custom_call.1} parent=5 // pred_region
        %s838 = ssub.s32 %s18, 2
      $region72: #{tpu_custom_call.1} parent=5 // pred_fallthru
        _
    $region6: #{tpu_custom_call.1} parent=1 // loop_footer
      %s22 = sadd.s32 1, %s18
    $region7: #{tpu_custom_call.1} parent=1 // loop_footer_branch
      %17 = sbr.rel target = $region3
    $region8: #{tpu_custom_call.1} parent=1 // loop_exit
      _
    %839 = vsyncpa [#allocation4], 1
    %s840 = scalar_lea.sflag [#allocation4], 1
    %841 = vsyncpa %s840, 1
    %842 = vsyncpa [#allocation7], 1
    %s843 = scalar_lea.sflag [#allocation7], 1
    %844 = vsyncpa %s843, 1
    %845 = vsyncpa [#allocation5], 1
    %s846 = scalar_lea.sflag [#allocation5], 1
    %847 = vsyncpa %s846, 1

</llo_original>
